<compile_context>
chip_gen: v7x
topology: tpu7x:2x2x1
jax: 0.10.0
libtpu: 0.0.40
codegen_flags: <defaults>
</compile_context>

<pallas_src>
import jax
import jax.numpy as jnp
from jax.experimental import pallas as pl
from jax.experimental.pallas import tpu as pltpu


def _round_up(x, m):
    return (x + m - 1) // m * m


# ------------------------------ Pallas kernel --------------------------------

def _gemm_kernel(a_ref, w_ref, o_ref):
    # One M-tile of the gather-GEMM: (TM, K) @ (K, Npad) -> (TM, Npad).
    # bf16 operands, f32 accumulation on the MXU (single pass, no HIGHEST).
    o_ref[...] = jnp.dot(a_ref[...], w_ref[...],
                         preferred_element_type=jnp.float32)


def _pallas_gemm(a, w, tm):
    """a: [M, K] (M % tm == 0), w: [K, N] (N % 128 == 0) -> [M, N] float32."""
    M, K = a.shape
    K2, N = w.shape
    assert K == K2 and M % tm == 0 and N % 128 == 0
    return pl.pallas_call(
        _gemm_kernel,
        out_shape=jax.ShapeDtypeStruct((M, N), jnp.float32),
        grid_spec=pltpu.PrefetchScalarGridSpec(
            num_scalar_prefetch=0,
            grid=(M // tm,),
            in_specs=[
                # Gathered-features tile; K (taps*Cin, a few hundred) is taken
                # whole, so there is no reduction axis in the grid.
                pl.BlockSpec((tm, K), lambda i: (i, 0)),
                # Full (tap- and lane-padded) weight matrix; same block every
                # grid step -> stays resident in VMEM.
                pl.BlockSpec((K, N), lambda i: (0, 0)),
            ],
            # Lane-dense output: last dim padded to a multiple of 128 so every
            # store is an unmasked full-lane vst.
            out_specs=pl.BlockSpec((tm, N), lambda i: (i, 0)),
        ),
        compiler_params=pltpu.CompilerParams(
            dimension_semantics=("parallel",)),
    )(a, w)


def _pick_tile_m(n_act):
    """Large M tiles (fewer ~0.35us pipeline steps) but keep >=2 grid steps
    when possible so both v7x TensorCores get work on the 'parallel' axis."""
    m = _round_up(max(n_act, 1), 128)
    if m <= 128:
        return 128
    return max(128, min(512, _round_up(m // 2, 128)))


# ------------------------- rulebook (index) building --------------------------

def _build_rulebook(coors, spatial_shape, batch_size, kernel_size, padding,
                    dilation, t_pad, m_pad):
    """Neighbour row indices for every active site and kernel tap.

    Returns int32 [m_pad, t_pad]; entries index into the feature matrix, and
    missing neighbours / padded taps / padded rows all point at row `n_act`
    (an all-zero row appended by the caller)."""
    n_act = coors.shape[0]
    D, H, W = spatial_shape

    # Dense (batch, z, y, x) -> active-row-index volume, -1 where inactive.
    idx_vol = jnp.full((batch_size, D, H, W), -1, dtype=jnp.int32)
    idx_vol = idx_vol.at[coors[:, 0], coors[:, 1], coors[:, 2],
                         coors[:, 3]].set(jnp.arange(n_act, dtype=jnp.int32))

    offs = []
    for kd in range(kernel_size):
        for kh in range(kernel_size):
            for kw in range(kernel_size):
                offs.append((kd * dilation - padding,
                             kh * dilation - padding,
                             kw * dilation - padding))
    offs = jnp.asarray(offs, dtype=jnp.int32)                  # [T, 3]
    t = offs.shape[0]

    nb = coors[:, None, 1:4].astype(jnp.int32) + offs[None]    # [N, T, 3]
    lim = jnp.asarray([D, H, W], dtype=jnp.int32)
    in_bounds = jnp.all((nb >= 0) & (nb < lim), axis=-1)       # [N, T]
    nb = jnp.clip(nb, 0, lim - 1)
    idx = idx_vol[coors[:, None, 0], nb[..., 0], nb[..., 1], nb[..., 2]]
    idx = jnp.where(in_bounds & (idx >= 0), idx, n_act)        # [N, T]

    # Fold tap padding (K/lane alignment) and row padding (M tiling) into the
    # rulebook, so the gather directly emits a padded, lane-aligned matrix and
    # no extra jnp.pad / HBM copy of the big gathered matrix is needed.
    return jnp.pad(idx, ((0, m_pad - n_act), (0, t_pad - t)),
                   constant_values=n_act)


def _prep_weight(w, t_pad, n_pad, dtype):
    """[Cout, Cin, kD, kH, kW] -> [t_pad*Cin, n_pad] matching the gather layout."""
    cout, cin = int(w.shape[0]), int(w.shape[1])
    t = int(w.shape[2] * w.shape[3] * w.shape[4])
    wt = jnp.transpose(w.reshape(cout, cin, t), (2, 1, 0))     # [T, Cin, Cout]
    wt = jnp.pad(wt, ((0, t_pad - t), (0, 0), (0, n_pad - cout)))
    return wt.reshape(t_pad * cin, n_pad).astype(dtype)


# --------------------------- module-equivalent wrapper ------------------------

class SubMConv3dTestPallas:
    """JAX/Pallas equivalent of SubMConv3dTestTorch: a stack of bias-free
    submanifold sparse 3-D convolutions (output active set == input sites)."""

    def __init__(self, num_layers, ndim, shape, in_channels, out_channels,
                 kernel_size, stride, padding, dilation, key):
        assert ndim == 3
        # Submanifold conv keeps the active set fixed; requires stride 1 and
        # "same"-centred padding (as spconv's SubMConv3d assumes).
        assert stride == 1
        assert 2 * padding == dilation * (kernel_size - 1)
        self.shape = tuple(shape)
        self.kernel_size = kernel_size
        self.padding = padding
        self.dilation = dilation
        self.compute_dtype = jnp.bfloat16   # MXU-native operands; f32 accumulate
        self.weights = []
        cin = in_channels
        for _ in range(num_layers):
            key, sub = jax.random.split(key)
            w = 0.1 * jax.random.normal(
                sub, (out_channels, cin) + (kernel_size,) * 3, dtype=jnp.float32)
            self.weights.append(w)
            cin = out_channels

    def __call__(self, features, coors, batch_size, use_pallas=True):
        """features: [N_active, Cin] f32; coors: [N_active, 4] int (b, z, y, x).
        Returns output features at the (unchanged) active sites."""
        n_act = features.shape[0]
        t = self.kernel_size ** 3
        t_pad = _round_up(t, 8)          # 27 -> 32; 32*Cin is 128-aligned here
        tm = _pick_tile_m(n_act)
        m_pad = _round_up(n_act, tm)
        nbr = _build_rulebook(coors, self.shape, batch_size, self.kernel_size,
                              self.padding, self.dilation, t_pad, m_pad)

        x = features
        for w in self.weights:
            cout, cin = int(w.shape[0]), int(w.shape[1])
            n_pad = _round_up(cout, 128)
            # One all-zero row serves missing neighbours and all padding.
            xz = jnp.concatenate(
                [x.astype(self.compute_dtype),
                 jnp.zeros((1, cin), self.compute_dtype)], axis=0)
            a = xz[nbr].reshape(m_pad, t_pad * cin)     # gather -> [M, K] bf16
            w_mat = _prep_weight(w, t_pad, n_pad, self.compute_dtype)
            if use_pallas:
                out = _pallas_gemm(a, w_mat, tm)        # [M, n_pad] f32
            else:                                       # glue-identical check path
                out = jnp.matmul(a, w_mat, preferred_element_type=jnp.float32)
            x = out[:n_act, :cout]
        return x


# ------------------------ independent dense reference -------------------------

def _subm_dense_reference(features, coors, batch_size, spatial_shape, weights,
                          stride, padding, dilation):
    """Scatter to a dense grid, run dense convs, and mask the output back to
    the active set after every layer (exactly the submanifold semantics);
    gather the result at the active sites."""
    D, H, W = spatial_shape
    cin = features.shape[1]
    b, z, y, x = coors[:, 0], coors[:, 1], coors[:, 2], coors[:, 3]
    dense = jnp.zeros((batch_size, D, H, W, cin),
                      jnp.float32).at[b, z, y, x].set(features)
    mask = jnp.zeros((batch_size, D, H, W, 1),
                     jnp.float32).at[b, z, y, x].set(1.0)
    out = dense
    for w in weights:
        out = jax.lax.conv_general_dilated(
            out, w,
            window_strides=(stride,) * 3,
            padding=[(padding, padding)] * 3,
            rhs_dilation=(dilation,) * 3,
            dimension_numbers=("NDHWC", "OIDHW", "NDHWC"),
            precision=jax.lax.Precision.HIGHEST)
        out = out * mask    # submanifold: outputs only at active input sites
    return out[b, z, y, x]


# ------------------------------------ main ------------------------------------

if __name__ == "__main__":
    key = jax.random.PRNGKey(0)

    # Small test consistent with the torch module: 2 SubMConv3d layers,
    # spatial shape 16^3, batch 2, Cin=4, Cout=8, k=3, stride=1, pad=1, dil=1,
    # ~30% of voxels active.
    num_layers, ndim = 2, 3
    shape = (16, 16, 16)
    batch_size = 2
    in_channels, out_channels = 4, 8
    kernel_size, stride, padding, dilation = 3, 1, 1, 1

    key, mkey, fkey, wkey = jax.random.split(key, 4)
    active = jax.random.bernoulli(mkey, 0.3, (batch_size,) + shape)
    coors = jnp.stack(jnp.nonzero(active), axis=1).astype(jnp.int32)  # [N, 4]
    n_act = int(coors.shape[0])
    features = jax.random.normal(fkey, (n_act, in_channels), dtype=jnp.float32)
    # Keep test data exactly bf16-representable so the f32 dense reference and
    # the bf16-operand / f32-accumulate kernel agree tightly.
    features = features.astype(jnp.bfloat16).astype(jnp.float32)

    model = SubMConv3dTestPallas(num_layers, ndim, shape, in_channels,
                                 out_channels, kernel_size, stride, padding,
                                 dilation, wkey)
    model.weights = [w.astype(jnp.bfloat16).astype(jnp.float32)
                     for w in model.weights]

    fwd = jax.jit(model.__call__, static_argnums=(2, 3))
    out = fwd(features, coors, batch_size, True)
    jax.block_until_ready(out)

    # Check 1 — Pallas GEMM vs identical-glue jnp GEMM (isolates the kernel).
    ref_gemm = fwd(features, coors, batch_size, False)
    assert out.shape == ref_gemm.shape, (out.shape, ref_gemm.shape)
    assert jnp.allclose(out, ref_gemm, rtol=1e-4, atol=1e-4), \
        float(jnp.max(jnp.abs(out - ref_gemm)))

    # Check 2 — independent dense masked-conv reference (validates the
    # submanifold sparse-conv semantics end to end).
    ref_dense = _subm_dense_reference(features, coors, batch_size, shape,
                                      model.weights, stride, padding, dilation)
    assert out.shape == ref_dense.shape, (out.shape, ref_dense.shape)
    assert jnp.allclose(out, ref_dense, rtol=1e-2, atol=1e-2), \
        float(jnp.max(jnp.abs(out - ref_dense)))

    print("KERNEL_OK")
</pallas_src>

<mosaic_0001>
module attributes {stable_mosaic.version = 11 : i64} {
  func.func @_gemm_kernel(%arg0: i32, %arg1: memref<512x128xbf16, #tpu.memory_space<vmem>>, %arg2: memref<128x128xbf16, #tpu.memory_space<vmem>>, %arg3: memref<512x128xf32, #tpu.memory_space<vmem>>) attributes {dimension_semantics = [#tpu.dimension_semantics<parallel>], iteration_bounds = array<i64: 5>, scalar_prefetch = 0 : i64, scratch_operands = 0 : i64, tpu.core_type = #tpu.core_type<tc>, window_params = [{transform_indices = @transform_0, window_bounds = array<i64: 512, 128>}, {pipeline_mode = #tpu.pipeline_mode<synchronous>, transform_indices = @transform_1, window_bounds = array<i64: 128, 128>}, {transform_indices = @transform_2, window_bounds = array<i64: 512, 128>}]} {
    %c0 = arith.constant 0 : index
    %c0_0 = arith.constant 0 : index
    %0 = vector.load %arg1[%c0, %c0_0] : memref<512x128xbf16, #tpu.memory_space<vmem>>, vector<512x128xbf16>
    %c0_1 = arith.constant 0 : index
    %c0_2 = arith.constant 0 : index
    %1 = vector.load %arg2[%c0_1, %c0_2] : memref<128x128xbf16, #tpu.memory_space<vmem>>, vector<128x128xbf16>
    %cst = arith.constant dense<0.000000e+00> : vector<512x128xf32>
    %2 = tpu.matmul %0, %1, %cst {dimension_numbers = #tpu.dot_dimension_numbers<[1], [0], [0], [1], [0, 0, 1, 1], [], []>} : vector<512x128xbf16>, vector<128x128xbf16>, vector<512x128xf32> -> vector<512x128xf32>
    %c0_3 = arith.constant 0 : index
    %c0_4 = arith.constant 0 : index
    %3 = vector.load %arg3[%c0_3, %c0_4] : memref<512x128xf32, #tpu.memory_space<vmem>>, vector<512x128xf32>
    tpu.vector_store %arg3[%c0_3, %c0_4], %2 {strides = array<i32>} : memref<512x128xf32, #tpu.memory_space<vmem>>, vector<512x128xf32>,
    return
  }
  func.func @transform_0(%arg0: i32) -> (i32, i32) {
    %c0_i32 = arith.constant 0 : i32
    %c0_i32_0 = arith.constant 0 : i32
    return %arg0, %c0_i32 : i32, i32
  }
  func.func @transform_1(%arg0: i32) -> (i32, i32) {
    %c0_i32 = arith.constant 0 : i32
    %c0_i32_0 = arith.constant 0 : i32
    %c0_i32_1 = arith.constant 0 : i32
    return %c0_i32, %c0_i32_0 : i32, i32
  }
  func.func @transform_2(%arg0: i32) -> (i32, i32) {
    %c0_i32 = arith.constant 0 : i32
    %c0_i32_0 = arith.constant 0 : i32
    return %arg0, %c0_i32 : i32, i32
  }
}

module attributes {stable_mosaic.version = 11 : i64} {
  func.func @_gemm_kernel(%arg0: i32, %arg1: memref<512x256xbf16, #tpu.memory_space<vmem>>, %arg2: memref<256x128xbf16, #tpu.memory_space<vmem>>, %arg3: memref<512x128xf32, #tpu.memory_space<vmem>>) attributes {dimension_semantics = [#tpu.dimension_semantics<parallel>], iteration_bounds = array<i64: 5>, scalar_prefetch = 0 : i64, scratch_operands = 0 : i64, tpu.core_type = #tpu.core_type<tc>, window_params = [{transform_indices = @transform_0, window_bounds = array<i64: 512, 256>}, {pipeline_mode = #tpu.pipeline_mode<synchronous>, transform_indices = @transform_1, window_bounds = array<i64: 256, 128>}, {transform_indices = @transform_2, window_bounds = array<i64: 512, 128>}]} {
    %c0 = arith.constant 0 : index
    %c0_0 = arith.constant 0 : index
    %0 = vector.load %arg1[%c0, %c0_0] : memref<512x256xbf16, #tpu.memory_space<vmem>>, vector<512x256xbf16>
    %c0_1 = arith.constant 0 : index
    %c0_2 = arith.constant 0 : index
    %1 = vector.load %arg2[%c0_1, %c0_2] : memref<256x128xbf16, #tpu.memory_space<vmem>>, vector<256x128xbf16>
    %cst = arith.constant dense<0.000000e+00> : vector<512x128xf32>
    %2 = tpu.matmul %0, %1, %cst {dimension_numbers = #tpu.dot_dimension_numbers<[1], [0], [0], [1], [0, 0, 1, 1], [], []>} : vector<512x256xbf16>, vector<256x128xbf16>, vector<512x128xf32> -> vector<512x128xf32>
    %c0_3 = arith.constant 0 : index
    %c0_4 = arith.constant 0 : index
    %3 = vector.load %arg3[%c0_3, %c0_4] : memref<512x128xf32, #tpu.memory_space<vmem>>, vector<512x128xf32>
    tpu.vector_store %arg3[%c0_3, %c0_4], %2 {strides = array<i32>} : memref<512x128xf32, #tpu.memory_space<vmem>>, vector<512x128xf32>,
    return
  }
  func.func @transform_0(%arg0: i32) -> (i32, i32) {
    %c0_i32 = arith.constant 0 : i32
    %c0_i32_0 = arith.constant 0 : i32
    return %arg0, %c0_i32 : i32, i32
  }
  func.func @transform_1(%arg0: i32) -> (i32, i32) {
    %c0_i32 = arith.constant 0 : i32
    %c0_i32_0 = arith.constant 0 : i32
    %c0_i32_1 = arith.constant 0 : i32
    return %c0_i32, %c0_i32_0 : i32, i32
  }
  func.func @transform_2(%arg0: i32) -> (i32, i32) {
    %c0_i32 = arith.constant 0 : i32
    %c0_i32_0 = arith.constant 0 : i32
    return %arg0, %c0_i32 : i32, i32
  }
}

</mosaic_0001>

<llo_original>
// kernel: a_call__.2
$region0: #{a_call__.2}
  #allocation0 [shape = 'u32[]', space=smem, size = 0x4, offset = 0x4, fixed_abs, tag = 'smem constant byte address 0x4 - core index']
  #allocation1 [shape = 'u32[144,128]{1,0:T(1,128)}', space=vmem, size = 0x12000, scoped, tag = 'internal scratch']
  %s0 = inlined_call_operand.vmem [shape: bf16[2560,128], index: 0, kind: input, shape index: {}]
  %s1 = inlined_call_operand.vmem [shape: bf16[128,128], index: 1, kind: input, shape index: {}]
  %s2 = inlined_call_operand.vmem [shape: f32[2560,128], index: 2, kind: output, shape index: {}]
  %s3 = sld [smem:[#allocation0]]
  $region41: #{a_call__.2} parent=0
    _
  %s5 = ssub.s32 1, %s3
  %s6 = scalar_select 0, %s5, %s3
  loop: start=0, step=1, limit=7
  $region2: #{a_call__.2} parent=0 // loop_pre_header
    _
  $region3: #{a_call__.2} parent=0 // loop_header
    %s8 = sphi 0, %s12
    %p9 = scmp.ge.s32.totalorder %s8, 7
    %s18 = sphi 0, %s20
    %s21 = sphi 0, %s18
    %s22 = sphi 0, %s21
    %s38 = sphi 0, %s22
    %s42 = sphi 0, %s42
    %s44 = sphi 0, %s42
    %s45 = sphi 0, %s44
    %s59 = sphi 0, %s45
    %s65 = sphi 0, %s67
    %s68 = sphi 0, %s65
    %s69 = sphi 0, %s68
    %s85 = sphi 0, %s69
  $region4: #{a_call__.2} parent=0 // loop_header_branch
    %11 = sbr.rel (%p9) target = $region8
  $region5: #{a_call__.2} parent=0 // loop_body
    %s13 = ssub.s32 %s8, 1
    %s14 = ssub.s32 %s8, 2
    %s15 = sadd.s32 %s8, 1
    %s16 = ssub.s32 %s8, %s15
    %p17 = scmp.eq.s32.totalorder %s16, 0
    %s19 = sadd.s32 %s18, 1
    %s20 = scalar_select %p17, %s18, %s19
    %p23 = pneg %p17
    %p24 = scmp.eq.s32.totalorder %s8, 4
    %p25 = por %p23, %p24
    %p26 = scmp.ne.s32.totalorder %s18, %s21
    %p27 = scmp.eq.s32.totalorder %s8, 0
    %p28 = por %p26, %p27
    %p29 = scmp.ne.s32.totalorder %s18, %s21
    %p30 = scmp.eq.s32.totalorder %s13, 4
    %p31 = por %p29, %p30
    %p32 = scmp.ne.s32.totalorder %s21, %s22
    %p33 = scmp.eq.s32.totalorder %s13, 0
    %p34 = por %p32, %p33
    %p35 = scmp.ne.s32.totalorder %s21, %s22
    %p36 = scmp.eq.s32.totalorder %s14, 4
    %p37 = por %p35, %p36
    %p39 = scmp.ne.s32.totalorder %s22, %s38
    %p40 = scmp.eq.s32.totalorder %s14, 0
    %p41 = por %p39, %p40
    %s43 = sadd.s32 %s42, 1
    %p46 = scmp.eq.s32.totalorder %s8, 4
    %p47 = scmp.ne.s32.totalorder %s42, %s44
    %p48 = scmp.eq.s32.totalorder %s8, 0
    %p49 = por %p47, %p48
    %p50 = scmp.ne.s32.totalorder %s42, %s44
    %p51 = scmp.eq.s32.totalorder %s13, 4
    %p52 = por %p50, %p51
    %p53 = scmp.ne.s32.totalorder %s44, %s45
    %p54 = scmp.eq.s32.totalorder %s13, 0
    %p55 = por %p53, %p54
    %p56 = scmp.ne.s32.totalorder %s44, %s45
    %p57 = scmp.eq.s32.totalorder %s14, 4
    %p58 = por %p56, %p57
    %p60 = scmp.ne.s32.totalorder %s45, %s59
    %p61 = scmp.eq.s32.totalorder %s14, 0
    %p62 = por %p60, %p61
    %s63 = ssub.s32 %s8, %s15
    %p64 = scmp.eq.s32.totalorder %s63, 0
    %s66 = sadd.s32 %s65, 1
    %s67 = scalar_select %p64, %s65, %s66
    %p70 = pneg %p64
    %p71 = scmp.eq.s32.totalorder %s8, 4
    %p72 = por %p70, %p71
    %p73 = scmp.ne.s32.totalorder %s65, %s68
    %p74 = scmp.eq.s32.totalorder %s8, 0
    %p75 = por %p73, %p74
    %p76 = scmp.ne.s32.totalorder %s65, %s68
    %p77 = scmp.eq.s32.totalorder %s13, 4
    %p78 = por %p76, %p77
    %p79 = scmp.ne.s32.totalorder %s68, %s69
    %p80 = scmp.eq.s32.totalorder %s13, 0
    %p81 = por %p79, %p80
    %p82 = scmp.ne.s32.totalorder %s68, %s69
    %p83 = scmp.eq.s32.totalorder %s14, 4
    %p84 = por %p82, %p83
    %p86 = scmp.ne.s32.totalorder %s69, %s85
    %p87 = scmp.eq.s32.totalorder %s14, 0
    %p88 = por %p86, %p87
    %p89 = scmp.le.s32.totalorder 1, %s8
    %p90 = scmp.lt.s32.totalorder %s8, 6
    %p91 = pnand %p89, %p90
    %p92 = pneg %p91
    // Predicated region
    $region9: #{a_call__.2} parent=5 // pred_check
      _
    $region10: #{a_call__.2} parent=5 // pred_check_branch
      %94 = sbr.rel (%p91) target = $region12
    $region11: #{a_call__.2} parent=5 // pred_region
      %s95 = ssub.s32 %s8, 1
      // Predicated region
      $region13: #{a_call__.2} parent=11 // pred_check
        %p96 = pneg %p55
      $region14: #{a_call__.2} parent=11 // pred_check_branch
        %98 = sbr.rel (%p96) target = $region16
      $region15: #{a_call__.2} parent=11 // pred_region
        _
      $region16: #{a_call__.2} parent=11 // pred_fallthru
        _
    $region12: #{a_call__.2} parent=5 // pred_fallthru
      _
    %p99 = scmp.lt.s32.totalorder %s8, 5
    // Predicated region
    $region17: #{a_call__.2} parent=5 // pred_check
      %p100 = pneg %p99
    $region18: #{a_call__.2} parent=5 // pred_check_branch
      %102 = sbr.rel (%p100) target = $region20
    $region19: #{a_call__.2} parent=5 // pred_region
      // Predicated region
      $region21: #{a_call__.2} parent=19 // pred_check
        %p103 = pneg %p28
      $region22: #{a_call__.2} parent=19 // pred_check_branch
        %105 = sbr.rel (%p103) target = $region24
      $region23: #{a_call__.2} parent=19 // pred_region
        %s106 = smul.u32 64, %s8
        %p107 = scmp.lt.s32.totalorder %s106, 319
        %s108 = scalar_select %p107, %s106, 319
        %s109 = smul.addr %s108, 4
        %s110 = scalar_lea.vmem %s0, %s109
        %s111 = smul.u32 64, %s8
      $region24: #{a_call__.2} parent=19 // pred_fallthru
        _
    $region20: #{a_call__.2} parent=5 // pred_fallthru
      _
    %p112 = scmp.le.s32.totalorder 1, %s8
    %p113 = scmp.lt.s32.totalorder %s8, 6
    %p114 = pnand %p112, %p113
    %p115 = pneg %p114
    // Predicated region
    $region25: #{a_call__.2} parent=5 // pred_check
      _
    $region26: #{a_call__.2} parent=5 // pred_check_branch
      %117 = sbr.rel (%p114) target = $region28
    $region27: #{a_call__.2} parent=5 // pred_region
      %s118 = ssub.s32 %s8, 1
      %s119 = smul.u32 64, %s13
      %p120 = scmp.lt.s32.totalorder %s119, 319
      %s121 = scalar_select %p120, %s119, 319
      %s122 = smul.addr %s121, 4
      %s123 = scalar_lea.vmem %s0, %s122
      %p124 = pneg %p34
      %p125 = pneg %p31
      %p126 = pneg %p55
      %p127 = pneg %p52
      %p128 = pneg %p81
      %p129 = pneg %p78
      %s130 = smul.u32 64, %s13
      %p131 = scmp.lt.s32.totalorder %s130, 319
      %s132 = scalar_select %p131, %s130, 319
      %s133 = smul.addr %s132, 8
      %s134 = scalar_lea.vmem %s2, %s133
      %s135 = smul.u32 64, %s13
      %p136 = scmp.lt.s32.totalorder %s135, 319
      %s137 = scalar_select %p136, %s135, 319
      %s138 = smul.addr %s137, 4
      %s139 = scalar_lea.vmem %s0, %s138
      %s140 = smul.u32 64, %s13
      %s141 = smul.u32 64, %s13
      %p142 = scmp.lt.s32.totalorder %s141, 319
      %s143 = scalar_select %p142, %s141, 319
      %s144 = smul.addr %s143, 8
      %s145 = scalar_lea.vmem %s2, %s144
      %s146 = smul.u32 64, %s13
      %v148 = vld [vmem:[%s139] sm:$0xf]
      %v149 = vld [vmem:[%s139 + $0x4] sm:$0xf]
      %v150 = vld [vmem:[%s139 + $0x8] sm:$0xf]
      %v151 = vld [vmem:[%s139 + $0xc] sm:$0xf]
      %v152 = vld [vmem:[%s139 + $0x10] sm:$0xf]
      %v153 = vld [vmem:[%s139 + $0x14] sm:$0xf]
      %v154 = vld [vmem:[%s139 + $0x18] sm:$0xf]
      %v155 = vld [vmem:[%s139 + $0x1c] sm:$0xf]
      %v156 = vld [vmem:[%s139 + $0x20] sm:$0xf]
      %v157 = vld [vmem:[%s139 + $0x24] sm:$0xf]
      %v158 = vld [vmem:[%s139 + $0x28] sm:$0xf]
      %v159 = vld [vmem:[%s139 + $0x2c] sm:$0xf]
      %v160 = vld [vmem:[%s139 + $0x30] sm:$0xf]
      %v161 = vld [vmem:[%s139 + $0x34] sm:$0xf]
      %v162 = vld [vmem:[%s139 + $0x38] sm:$0xf]
      %v163 = vld [vmem:[%s139 + $0x3c] sm:$0xf]
      %v164 = vld [vmem:[%s139 + $0x40] sm:$0xf]
      %v165 = vld [vmem:[%s139 + $0x44] sm:$0xf]
      %v166 = vld [vmem:[%s139 + $0x48] sm:$0xf]
      %v167 = vld [vmem:[%s139 + $0x4c] sm:$0xf]
      %v168 = vld [vmem:[%s139 + $0x50] sm:$0xf]
      %v169 = vld [vmem:[%s139 + $0x54] sm:$0xf]
      %v170 = vld [vmem:[%s139 + $0x58] sm:$0xf]
      %v171 = vld [vmem:[%s139 + $0x5c] sm:$0xf]
      %v172 = vld [vmem:[%s139 + $0x60] sm:$0xf]
      %v173 = vld [vmem:[%s139 + $0x64] sm:$0xf]
      %v174 = vld [vmem:[%s139 + $0x68] sm:$0xf]
      %v175 = vld [vmem:[%s139 + $0x6c] sm:$0xf]
      %v176 = vld [vmem:[%s139 + $0x70] sm:$0xf]
      %v177 = vld [vmem:[%s139 + $0x74] sm:$0xf]
      %v178 = vld [vmem:[%s139 + $0x78] sm:$0xf]
      %v179 = vld [vmem:[%s139 + $0x7c] sm:$0xf]
      %v180 = vld [vmem:[%s139 + $0x80] sm:$0xf]
      %v181 = vld [vmem:[%s139 + $0x84] sm:$0xf]
      %v182 = vld [vmem:[%s139 + $0x88] sm:$0xf]
      %v183 = vld [vmem:[%s139 + $0x8c] sm:$0xf]
      %v184 = vld [vmem:[%s139 + $0x90] sm:$0xf]
      %v185 = vld [vmem:[%s139 + $0x94] sm:$0xf]
      %v186 = vld [vmem:[%s139 + $0x98] sm:$0xf]
      %v187 = vld [vmem:[%s139 + $0x9c] sm:$0xf]
      %v188 = vld [vmem:[%s139 + $0xa0] sm:$0xf]
      %v189 = vld [vmem:[%s139 + $0xa4] sm:$0xf]
      %v190 = vld [vmem:[%s139 + $0xa8] sm:$0xf]
      %v191 = vld [vmem:[%s139 + $0xac] sm:$0xf]
      %v192 = vld [vmem:[%s139 + $0xb0] sm:$0xf]
      %v193 = vld [vmem:[%s139 + $0xb4] sm:$0xf]
      %v194 = vld [vmem:[%s139 + $0xb8] sm:$0xf]
      %v195 = vld [vmem:[%s139 + $0xbc] sm:$0xf]
      %v196 = vld [vmem:[%s139 + $0xc0] sm:$0xf]
      %v197 = vld [vmem:[%s139 + $0xc4] sm:$0xf]
      %v198 = vld [vmem:[%s139 + $0xc8] sm:$0xf]
      %v199 = vld [vmem:[%s139 + $0xcc] sm:$0xf]
      %v200 = vld [vmem:[%s139 + $0xd0] sm:$0xf]
      %v201 = vld [vmem:[%s139 + $0xd4] sm:$0xf]
      %v202 = vld [vmem:[%s139 + $0xd8] sm:$0xf]
      %v203 = vld [vmem:[%s139 + $0xdc] sm:$0xf]
      %v204 = vld [vmem:[%s139 + $0xe0] sm:$0xf]
      %v205 = vld [vmem:[%s139 + $0xe4] sm:$0xf]
      %v206 = vld [vmem:[%s139 + $0xe8] sm:$0xf]
      %v207 = vld [vmem:[%s139 + $0xec] sm:$0xf]
      %v208 = vld [vmem:[%s139 + $0xf0] sm:$0xf]
      %v209 = vld [vmem:[%s139 + $0xf4] sm:$0xf]
      %v210 = vld [vmem:[%s139 + $0xf8] sm:$0xf]
      %v211 = vld [vmem:[%s139 + $0xfc] sm:$0xf]
      %v212 = vld [vmem:[%s1] sm:$0xf]
      %v213 = vld [vmem:[%s1 + $0x4] sm:$0xf]
      %v214 = vld [vmem:[%s1 + $0x8] sm:$0xf]
      %v215 = vld [vmem:[%s1 + $0xc] sm:$0xf]
      %v216 = vld [vmem:[%s1 + $0x10] sm:$0xf]
      %v217 = vld [vmem:[%s1 + $0x14] sm:$0xf]
      %v218 = vld [vmem:[%s1 + $0x18] sm:$0xf]
      %v219 = vld [vmem:[%s1 + $0x1c] sm:$0xf]
      %v220 = vld [vmem:[%s1 + $0x20] sm:$0xf]
      %v221 = vld [vmem:[%s1 + $0x24] sm:$0xf]
      %v222 = vld [vmem:[%s1 + $0x28] sm:$0xf]
      %v223 = vld [vmem:[%s1 + $0x2c] sm:$0xf]
      %v224 = vld [vmem:[%s1 + $0x30] sm:$0xf]
      %v225 = vld [vmem:[%s1 + $0x34] sm:$0xf]
      %v226 = vld [vmem:[%s1 + $0x38] sm:$0xf]
      %v227 = vld [vmem:[%s1 + $0x3c] sm:$0xf]
      %v292 = vunpack.c.l.b16 %v148
      %v293 = vunpack.c.l.b16 %v149
      %v294 = vunpack.c.l.b16 %v150
      %v295 = vunpack.c.l.b16 %v151
      %v296 = vunpack.c.l.b16 %v152
      %v297 = vunpack.c.l.b16 %v153
      %v298 = vunpack.c.l.b16 %v154
      %v299 = vunpack.c.l.b16 %v155
      %v300 = vunpack.c.l.b16 %v156
      %v301 = vunpack.c.l.b16 %v157
      %v302 = vunpack.c.l.b16 %v158
      %v303 = vunpack.c.l.b16 %v159
      %v304 = vunpack.c.l.b16 %v160
      %v305 = vunpack.c.l.b16 %v161
      %v306 = vunpack.c.l.b16 %v162
      %v307 = vunpack.c.l.b16 %v163
      %v308 = vunpack.c.l.b16 %v164
      %v309 = vunpack.c.l.b16 %v165
      %v310 = vunpack.c.l.b16 %v166
      %v311 = vunpack.c.l.b16 %v167
      %v312 = vunpack.c.l.b16 %v168
      %v313 = vunpack.c.l.b16 %v169
      %v314 = vunpack.c.l.b16 %v170
      %v315 = vunpack.c.l.b16 %v171
      %v316 = vunpack.c.l.b16 %v172
      %v317 = vunpack.c.l.b16 %v173
      %v318 = vunpack.c.l.b16 %v174
      %v319 = vunpack.c.l.b16 %v175
      %v320 = vunpack.c.l.b16 %v176
      %v321 = vunpack.c.l.b16 %v177
      %v322 = vunpack.c.l.b16 %v178
      %v323 = vunpack.c.l.b16 %v179
      %v324 = vunpack.c.l.b16 %v180
      %v325 = vunpack.c.l.b16 %v181
      %v326 = vunpack.c.l.b16 %v182
      %v327 = vunpack.c.l.b16 %v183
      %v328 = vunpack.c.l.b16 %v184
      %v329 = vunpack.c.l.b16 %v185
      %v330 = vunpack.c.l.b16 %v186
      %v331 = vunpack.c.l.b16 %v187
      %v332 = vunpack.c.l.b16 %v188
      %v333 = vunpack.c.l.b16 %v189
      %v334 = vunpack.c.l.b16 %v190
      %v335 = vunpack.c.l.b16 %v191
      %v336 = vunpack.c.l.b16 %v192
      %v337 = vunpack.c.l.b16 %v193
      %v338 = vunpack.c.l.b16 %v194
      %v339 = vunpack.c.l.b16 %v195
      %v340 = vunpack.c.l.b16 %v196
      %v341 = vunpack.c.l.b16 %v197
      %v342 = vunpack.c.l.b16 %v198
      %v343 = vunpack.c.l.b16 %v199
      %v344 = vunpack.c.l.b16 %v200
      %v345 = vunpack.c.l.b16 %v201
      %v346 = vunpack.c.l.b16 %v202
      %v347 = vunpack.c.l.b16 %v203
      %v348 = vunpack.c.l.b16 %v204
      %v349 = vunpack.c.l.b16 %v205
      %v350 = vunpack.c.l.b16 %v206
      %v351 = vunpack.c.l.b16 %v207
      %v352 = vunpack.c.l.b16 %v208
      %v353 = vunpack.c.l.b16 %v209
      %v354 = vunpack.c.l.b16 %v210
      %v355 = vunpack.c.l.b16 %v211
      %v356 = vpack.c.b16 %v293, %v292
      %v357 = vpack.c.b16 %v295, %v294
      %v358 = vpack.c.b16 %v297, %v296
      %v359 = vpack.c.b16 %v299, %v298
      %v360 = vpack.c.b16 %v301, %v300
      %v361 = vpack.c.b16 %v303, %v302
      %v362 = vpack.c.b16 %v305, %v304
      %v363 = vpack.c.b16 %v307, %v306
      %v364 = vpack.c.b16 %v309, %v308
      %v365 = vpack.c.b16 %v311, %v310
      %v366 = vpack.c.b16 %v313, %v312
      %v367 = vpack.c.b16 %v315, %v314
      %v368 = vpack.c.b16 %v317, %v316
      %v369 = vpack.c.b16 %v319, %v318
      %v370 = vpack.c.b16 %v321, %v320
      %v371 = vpack.c.b16 %v323, %v322
      %v372 = vpack.c.b16 %v325, %v324
      %v373 = vpack.c.b16 %v327, %v326
      %v374 = vpack.c.b16 %v329, %v328
      %v375 = vpack.c.b16 %v331, %v330
      %v376 = vpack.c.b16 %v333, %v332
      %v377 = vpack.c.b16 %v335, %v334
      %v378 = vpack.c.b16 %v337, %v336
      %v379 = vpack.c.b16 %v339, %v338
      %v380 = vpack.c.b16 %v341, %v340
      %v381 = vpack.c.b16 %v343, %v342
      %v382 = vpack.c.b16 %v345, %v344
      %v383 = vpack.c.b16 %v347, %v346
      %v384 = vpack.c.b16 %v349, %v348
      %v385 = vpack.c.b16 %v351, %v350
      %v386 = vpack.c.b16 %v353, %v352
      %v387 = vpack.c.b16 %v355, %v354
      %v436 = vunpack.c.l.b16 %v212
      %v437 = vunpack.c.l.b16 %v213
      %v438 = vunpack.c.l.b16 %v214
      %v439 = vunpack.c.l.b16 %v215
      %v440 = vunpack.c.l.b16 %v216
      %v441 = vunpack.c.l.b16 %v217
      %v442 = vunpack.c.l.b16 %v218
      %v443 = vunpack.c.l.b16 %v219
      %v444 = vunpack.c.l.b16 %v220
      %v445 = vunpack.c.l.b16 %v221
      %v446 = vunpack.c.l.b16 %v222
      %v447 = vunpack.c.l.b16 %v223
      %v448 = vunpack.c.l.b16 %v224
      %v449 = vunpack.c.l.b16 %v225
      %v450 = vunpack.c.l.b16 %v226
      %v451 = vunpack.c.l.b16 %v227
      %v452 = vpack.c.b16 %v437, %v436
      %v453 = vpack.c.b16 %v439, %v438
      %v454 = vpack.c.b16 %v441, %v440
      %v455 = vpack.c.b16 %v443, %v442
      %v456 = vpack.c.b16 %v445, %v444
      %v457 = vpack.c.b16 %v447, %v446
      %v458 = vpack.c.b16 %v449, %v448
      %v459 = vpack.c.b16 %v451, %v450
      %468 = vmatprep.subr.bf16.mxu0 0
      %469 = vmatpush1.bf16.msra.mxu0 %v452
      %470 = vmatprep.subr.bf16.mxu0 0
      %471 = vmatpush1.bf16.msra.mxu0 %v453
      %472 = vmatprep.subr.bf16.mxu0 0
      %473 = vmatpush1.bf16.msra.mxu0 %v454
      %474 = vmatprep.subr.bf16.mxu0 0
      %475 = vmatpush1.bf16.msra.mxu0 %v455
      %476 = vmatprep.subr.bf16.mxu0 0
      %477 = vmatpush1.bf16.msra.mxu0 %v456
      %478 = vmatprep.subr.bf16.mxu0 0
      %479 = vmatpush1.bf16.msra.mxu0 %v457
      %480 = vmatprep.subr.bf16.mxu0 0
      %481 = vmatpush1.bf16.msra.mxu0 %v458
      %482 = vmatprep.subr.bf16.mxu0 0
      %483 = vmatpush1.bf16.msra.mxu0 %v459
      %484 = vmatprep.subr.bf16.mxu0 0
      %485 = vmatpush1.bf16.msra.mxu0 0
      %486 = vmatprep.subr.bf16.mxu0 0
      %487 = vmatpush1.bf16.msra.mxu0 0
      %488 = vmatprep.subr.bf16.mxu0 0
      %489 = vmatpush1.bf16.msra.mxu0 0
      %490 = vmatprep.subr.bf16.mxu0 0
      %491 = vmatpush1.bf16.msra.mxu0 0
      %492 = vmatprep.subr.bf16.mxu0 0
      %493 = vmatpush1.bf16.msra.mxu0 0
      %494 = vmatprep.subr.bf16.mxu0 0
      %495 = vmatpush1.bf16.msra.mxu0 0
      %496 = vmatprep.subr.bf16.mxu0 0
      %497 = vmatpush1.bf16.msra.mxu0 0
      %498 = vmatprep.subr.bf16.mxu0 0
      %499 = vmatpush1.bf16.msra.mxu0 0
      %500 = vmatprep.mubr.bf16.mxu0 0
      %501 = vmatmul.mubr.bf16.gmra.mrb[0].mxu0 %v356
      %v502 = vpop.f32.mrb[0].mxu0
      %v503 = vadd.f32 0.0, %v502
      %v504 = vpop.f32.mrb[0].mxu0
      %v505 = vpop.f32.mrb[0].mxu0
      %v506 = vadd.f32 0.0, %v505
      %v507 = vpop.f32.mrb[0].mxu0
      %508 = vmatprep.mubr.bf16.mxu0 0
      %509 = vmatmul.mubr.bf16.gmra.mrb[0].mxu0 %v357
      %v510 = vpop.f32.mrb[0].mxu0
      %v511 = vadd.f32 0.0, %v510
      %v512 = vpop.f32.mrb[0].mxu0
      %v513 = vpop.f32.mrb[0].mxu0
      %v514 = vadd.f32 0.0, %v513
      %v515 = vpop.f32.mrb[0].mxu0
      %516 = vmatprep.mubr.bf16.mxu0 0
      %517 = vmatmul.mubr.bf16.gmra.mrb[0].mxu0 %v358
      %v518 = vpop.f32.mrb[0].mxu0
      %v519 = vadd.f32 0.0, %v518
      %v520 = vpop.f32.mrb[0].mxu0
      %v521 = vpop.f32.mrb[0].mxu0
      %v522 = vadd.f32 0.0, %v521
      %v523 = vpop.f32.mrb[0].mxu0
      %524 = vmatprep.mubr.bf16.mxu0 0
      %525 = vmatmul.mubr.bf16.gmra.mrb[0].mxu0 %v359
      %v526 = vpop.f32.mrb[0].mxu0
      %v527 = vadd.f32 0.0, %v526
      %v528 = vpop.f32.mrb[0].mxu0
      %v529 = vpop.f32.mrb[0].mxu0
      %v530 = vadd.f32 0.0, %v529
      %v531 = vpop.f32.mrb[0].mxu0
      %532 = vmatprep.mubr.bf16.mxu0 0
      %533 = vmatmul.mubr.bf16.gmra.mrb[0].mxu0 %v360
      %v534 = vpop.f32.mrb[0].mxu0
      %v535 = vadd.f32 0.0, %v534
      %v536 = vpop.f32.mrb[0].mxu0
      %v537 = vpop.f32.mrb[0].mxu0
      %v538 = vadd.f32 0.0, %v537
      %v539 = vpop.f32.mrb[0].mxu0
      %540 = vmatprep.mubr.bf16.mxu0 0
      %541 = vmatmul.mubr.bf16.gmra.mrb[0].mxu0 %v361
      %v542 = vpop.f32.mrb[0].mxu0
      %v543 = vadd.f32 0.0, %v542
      %v544 = vpop.f32.mrb[0].mxu0
      %v545 = vpop.f32.mrb[0].mxu0
      %v546 = vadd.f32 0.0, %v545
      %v547 = vpop.f32.mrb[0].mxu0
      %548 = vmatprep.mubr.bf16.mxu0 0
      %549 = vmatmul.mubr.bf16.gmra.mrb[0].mxu0 %v362
      %v550 = vpop.f32.mrb[0].mxu0
      %v551 = vadd.f32 0.0, %v550
      %v552 = vpop.f32.mrb[0].mxu0
      %v553 = vpop.f32.mrb[0].mxu0
      %v554 = vadd.f32 0.0, %v553
      %v555 = vpop.f32.mrb[0].mxu0
      %556 = vmatprep.mubr.bf16.mxu0 0
      %557 = vmatmul.mubr.bf16.gmra.mrb[0].mxu0 %v363
      %v558 = vpop.f32.mrb[0].mxu0
      %v559 = vadd.f32 0.0, %v558
      %v560 = vpop.f32.mrb[0].mxu0
      %v561 = vpop.f32.mrb[0].mxu0
      %v562 = vadd.f32 0.0, %v561
      %v563 = vpop.f32.mrb[0].mxu0
      %564 = vmatprep.mubr.bf16.mxu0 0
      %565 = vmatmul.mubr.bf16.gmra.mrb[0].mxu0 %v364
      %v566 = vpop.f32.mrb[0].mxu0
      %v567 = vadd.f32 0.0, %v566
      %v568 = vpop.f32.mrb[0].mxu0
      %v569 = vpop.f32.mrb[0].mxu0
      %v570 = vadd.f32 0.0, %v569
      %v571 = vpop.f32.mrb[0].mxu0
      %572 = vmatprep.mubr.bf16.mxu0 0
      %573 = vmatmul.mubr.bf16.gmra.mrb[0].mxu0 %v365
      %v574 = vpop.f32.mrb[0].mxu0
      %v575 = vadd.f32 0.0, %v574
      %v576 = vpop.f32.mrb[0].mxu0
      %v577 = vpop.f32.mrb[0].mxu0
      %v578 = vadd.f32 0.0, %v577
      %v579 = vpop.f32.mrb[0].mxu0
      %580 = vmatprep.mubr.bf16.mxu0 0
      %581 = vmatmul.mubr.bf16.gmra.mrb[0].mxu0 %v366
      %v582 = vpop.f32.mrb[0].mxu0
      %v583 = vadd.f32 0.0, %v582
      %v584 = vpop.f32.mrb[0].mxu0
      %v585 = vpop.f32.mrb[0].mxu0
      %v586 = vadd.f32 0.0, %v585
      %v587 = vpop.f32.mrb[0].mxu0
      %588 = vmatprep.mubr.bf16.mxu0 0
      %589 = vmatmul.mubr.bf16.gmra.mrb[0].mxu0 %v367
      %v590 = vpop.f32.mrb[0].mxu0
      %v591 = vadd.f32 0.0, %v590
      %v592 = vpop.f32.mrb[0].mxu0
      %v593 = vpop.f32.mrb[0].mxu0
      %v594 = vadd.f32 0.0, %v593
      %v595 = vpop.f32.mrb[0].mxu0
      %596 = vmatprep.mubr.bf16.mxu0 0
      %597 = vmatmul.mubr.bf16.gmra.mrb[0].mxu0 %v368
      %v598 = vpop.f32.mrb[0].mxu0
      %v599 = vadd.f32 0.0, %v598
      %v600 = vpop.f32.mrb[0].mxu0
      %v601 = vpop.f32.mrb[0].mxu0
      %v602 = vadd.f32 0.0, %v601
      %v603 = vpop.f32.mrb[0].mxu0
      %604 = vmatprep.mubr.bf16.mxu0 0
      %605 = vmatmul.mubr.bf16.gmra.mrb[0].mxu0 %v369
      %v606 = vpop.f32.mrb[0].mxu0
      %v607 = vadd.f32 0.0, %v606
      %v608 = vpop.f32.mrb[0].mxu0
      %v609 = vpop.f32.mrb[0].mxu0
      %v610 = vadd.f32 0.0, %v609
      %v611 = vpop.f32.mrb[0].mxu0
      %612 = vmatprep.mubr.bf16.mxu0 0
      %613 = vmatmul.mubr.bf16.gmra.mrb[0].mxu0 %v370
      %v614 = vpop.f32.mrb[0].mxu0
      %v615 = vadd.f32 0.0, %v614
      %v616 = vpop.f32.mrb[0].mxu0
      %v617 = vpop.f32.mrb[0].mxu0
      %v618 = vadd.f32 0.0, %v617
      %v619 = vpop.f32.mrb[0].mxu0
      %620 = vmatprep.mubr.bf16.mxu0 0
      %621 = vmatmul.mubr.bf16.gmra.mrb[0].mxu0 %v371
      %v622 = vpop.f32.mrb[0].mxu0
      %v623 = vadd.f32 0.0, %v622
      %v624 = vpop.f32.mrb[0].mxu0
      %v625 = vpop.f32.mrb[0].mxu0
      %v626 = vadd.f32 0.0, %v625
      %v627 = vpop.f32.mrb[0].mxu0
      %628 = vmatprep.mubr.bf16.mxu0 0
      %629 = vmatmul.mubr.bf16.gmra.mrb[0].mxu0 %v372
      %v630 = vpop.f32.mrb[0].mxu0
      %v631 = vadd.f32 0.0, %v630
      %v632 = vpop.f32.mrb[0].mxu0
      %v633 = vpop.f32.mrb[0].mxu0
      %v634 = vadd.f32 0.0, %v633
      %v635 = vpop.f32.mrb[0].mxu0
      %636 = vmatprep.mubr.bf16.mxu0 0
      %637 = vmatmul.mubr.bf16.gmra.mrb[0].mxu0 %v373
      %v638 = vpop.f32.mrb[0].mxu0
      %v639 = vadd.f32 0.0, %v638
      %v640 = vpop.f32.mrb[0].mxu0
      %v641 = vpop.f32.mrb[0].mxu0
      %v642 = vadd.f32 0.0, %v641
      %v643 = vpop.f32.mrb[0].mxu0
      %644 = vmatprep.mubr.bf16.mxu0 0
      %645 = vmatmul.mubr.bf16.gmra.mrb[0].mxu0 %v374
      %v646 = vpop.f32.mrb[0].mxu0
      %v647 = vadd.f32 0.0, %v646
      %v648 = vpop.f32.mrb[0].mxu0
      %v649 = vpop.f32.mrb[0].mxu0
      %v650 = vadd.f32 0.0, %v649
      %v651 = vpop.f32.mrb[0].mxu0
      %652 = vmatprep.mubr.bf16.mxu0 0
      %653 = vmatmul.mubr.bf16.gmra.mrb[0].mxu0 %v375
      %v654 = vpop.f32.mrb[0].mxu0
      %v655 = vadd.f32 0.0, %v654
      %v656 = vpop.f32.mrb[0].mxu0
      %v657 = vpop.f32.mrb[0].mxu0
      %v658 = vadd.f32 0.0, %v657
      %v659 = vpop.f32.mrb[0].mxu0
      %660 = vmatprep.mubr.bf16.mxu0 0
      %661 = vmatmul.mubr.bf16.gmra.mrb[0].mxu0 %v376
      %v662 = vpop.f32.mrb[0].mxu0
      %v663 = vadd.f32 0.0, %v662
      %v664 = vpop.f32.mrb[0].mxu0
      %v665 = vpop.f32.mrb[0].mxu0
      %v666 = vadd.f32 0.0, %v665
      %v667 = vpop.f32.mrb[0].mxu0
      %668 = vmatprep.mubr.bf16.mxu0 0
      %669 = vmatmul.mubr.bf16.gmra.mrb[0].mxu0 %v377
      %v670 = vpop.f32.mrb[0].mxu0
      %v671 = vadd.f32 0.0, %v670
      %v672 = vpop.f32.mrb[0].mxu0
      %v673 = vpop.f32.mrb[0].mxu0
      %v674 = vadd.f32 0.0, %v673
      %v675 = vpop.f32.mrb[0].mxu0
      %676 = vmatprep.mubr.bf16.mxu0 0
      %677 = vmatmul.mubr.bf16.gmra.mrb[0].mxu0 %v378
      %v678 = vpop.f32.mrb[0].mxu0
      %v679 = vadd.f32 0.0, %v678
      %v680 = vpop.f32.mrb[0].mxu0
      %v681 = vpop.f32.mrb[0].mxu0
      %v682 = vadd.f32 0.0, %v681
      %v683 = vpop.f32.mrb[0].mxu0
      %684 = vmatprep.mubr.bf16.mxu0 0
      %685 = vmatmul.mubr.bf16.gmra.mrb[0].mxu0 %v379
      %v686 = vpop.f32.mrb[0].mxu0
      %v687 = vadd.f32 0.0, %v686
      %v688 = vpop.f32.mrb[0].mxu0
      %v689 = vpop.f32.mrb[0].mxu0
      %v690 = vadd.f32 0.0, %v689
      %v691 = vpop.f32.mrb[0].mxu0
      %692 = vmatprep.mubr.bf16.mxu0 0
      %693 = vmatmul.mubr.bf16.gmra.mrb[0].mxu0 %v380
      %v694 = vpop.f32.mrb[0].mxu0
      %v695 = vadd.f32 0.0, %v694
      %v696 = vpop.f32.mrb[0].mxu0
      %v697 = vpop.f32.mrb[0].mxu0
      %v698 = vadd.f32 0.0, %v697
      %v699 = vpop.f32.mrb[0].mxu0
      %700 = vmatprep.mubr.bf16.mxu0 0
      %701 = vmatmul.mubr.bf16.gmra.mrb[0].mxu0 %v381
      %v702 = vpop.f32.mrb[0].mxu0
      %v703 = vadd.f32 0.0, %v702
      %v704 = vpop.f32.mrb[0].mxu0
      %v705 = vpop.f32.mrb[0].mxu0
      %v706 = vadd.f32 0.0, %v705
      %v707 = vpop.f32.mrb[0].mxu0
      %708 = vmatprep.mubr.bf16.mxu0 0
      %709 = vmatmul.mubr.bf16.gmra.mrb[0].mxu0 %v382
      %v710 = vpop.f32.mrb[0].mxu0
      %v711 = vadd.f32 0.0, %v710
      %v712 = vpop.f32.mrb[0].mxu0
      %v713 = vpop.f32.mrb[0].mxu0
      %v714 = vadd.f32 0.0, %v713
      %v715 = vpop.f32.mrb[0].mxu0
      %716 = vmatprep.mubr.bf16.mxu0 0
      %717 = vmatmul.mubr.bf16.gmra.mrb[0].mxu0 %v383
      %v718 = vpop.f32.mrb[0].mxu0
      %v719 = vadd.f32 0.0, %v718
      %v720 = vpop.f32.mrb[0].mxu0
      %v721 = vpop.f32.mrb[0].mxu0
      %v722 = vadd.f32 0.0, %v721
      %v723 = vpop.f32.mrb[0].mxu0
      %724 = vmatprep.mubr.bf16.mxu0 0
      %725 = vmatmul.mubr.bf16.gmra.mrb[0].mxu0 %v384
      %v726 = vpop.f32.mrb[0].mxu0
      %v727 = vadd.f32 0.0, %v726
      %v728 = vpop.f32.mrb[0].mxu0
      %v729 = vpop.f32.mrb[0].mxu0
      %v730 = vadd.f32 0.0, %v729
      %v731 = vpop.f32.mrb[0].mxu0
      %732 = vmatprep.mubr.bf16.mxu0 0
      %733 = vmatmul.mubr.bf16.gmra.mrb[0].mxu0 %v385
      %v734 = vpop.f32.mrb[0].mxu0
      %v735 = vadd.f32 0.0, %v734
      %v736 = vpop.f32.mrb[0].mxu0
      %v737 = vpop.f32.mrb[0].mxu0
      %v738 = vadd.f32 0.0, %v737
      %v739 = vpop.f32.mrb[0].mxu0
      %740 = vmatprep.mubr.bf16.mxu0 0
      %741 = vmatmul.mubr.bf16.gmra.mrb[0].mxu0 %v386
      %v742 = vpop.f32.mrb[0].mxu0
      %v743 = vadd.f32 0.0, %v742
      %v744 = vpop.f32.mrb[0].mxu0
      %v745 = vpop.f32.mrb[0].mxu0
      %v746 = vadd.f32 0.0, %v745
      %v747 = vpop.f32.mrb[0].mxu0
      %748 = vmatprep.mubr.bf16.mxu0 0
      %749 = vmatmul.mubr.bf16.gmra.mrb[0].mxu0 %v387
      %v750 = vpop.f32.mrb[0].mxu0
      %v751 = vadd.f32 0.0, %v750
      %v752 = vpop.f32.mrb[0].mxu0
      %v753 = vpop.f32.mrb[0].mxu0
      %v754 = vadd.f32 0.0, %v753
      %v755 = vpop.f32.mrb[0].mxu0
      %756 = vdwg.mxu0
      %757 = vst [vmem:[%s145] sm:$0xff] %v503
      %758 = vst [vmem:[%s145 + $0x8] sm:$0xff] %v506
      %759 = vst [vmem:[%s145 + $0x10] sm:$0xff] %v511
      %760 = vst [vmem:[%s145 + $0x18] sm:$0xff] %v514
      %761 = vst [vmem:[%s145 + $0x20] sm:$0xff] %v519
      %762 = vst [vmem:[%s145 + $0x28] sm:$0xff] %v522
      %763 = vst [vmem:[%s145 + $0x30] sm:$0xff] %v527
      %764 = vst [vmem:[%s145 + $0x38] sm:$0xff] %v530
      %765 = vst [vmem:[%s145 + $0x40] sm:$0xff] %v535
      %766 = vst [vmem:[%s145 + $0x48] sm:$0xff] %v538
      %767 = vst [vmem:[%s145 + $0x50] sm:$0xff] %v543
      %768 = vst [vmem:[%s145 + $0x58] sm:$0xff] %v546
      %769 = vst [vmem:[%s145 + $0x60] sm:$0xff] %v551
      %770 = vst [vmem:[%s145 + $0x68] sm:$0xff] %v554
      %771 = vst [vmem:[%s145 + $0x70] sm:$0xff] %v559
      %772 = vst [vmem:[%s145 + $0x78] sm:$0xff] %v562
      %773 = vst [vmem:[%s145 + $0x80] sm:$0xff] %v567
      %774 = vst [vmem:[%s145 + $0x88] sm:$0xff] %v570
      %775 = vst [vmem:[%s145 + $0x90] sm:$0xff] %v575
      %776 = vst [vmem:[%s145 + $0x98] sm:$0xff] %v578
      %777 = vst [vmem:[%s145 + $0xa0] sm:$0xff] %v583
      %778 = vst [vmem:[%s145 + $0xa8] sm:$0xff] %v586
      %779 = vst [vmem:[%s145 + $0xb0] sm:$0xff] %v591
      %780 = vst [vmem:[%s145 + $0xb8] sm:$0xff] %v594
      %781 = vst [vmem:[%s145 + $0xc0] sm:$0xff] %v599
      %782 = vst [vmem:[%s145 + $0xc8] sm:$0xff] %v602
      %783 = vst [vmem:[%s145 + $0xd0] sm:$0xff] %v607
      %784 = vst [vmem:[%s145 + $0xd8] sm:$0xff] %v610
      %785 = vst [vmem:[%s145 + $0xe0] sm:$0xff] %v615
      %786 = vst [vmem:[%s145 + $0xe8] sm:$0xff] %v618
      %787 = vst [vmem:[%s145 + $0xf0] sm:$0xff] %v623
      %788 = vst [vmem:[%s145 + $0xf8] sm:$0xff] %v626
      %789 = vst [vmem:[%s145 + $0x100] sm:$0xff] %v631
      %790 = vst [vmem:[%s145 + $0x108] sm:$0xff] %v634
      %791 = vst [vmem:[%s145 + $0x110] sm:$0xff] %v639
      %792 = vst [vmem:[%s145 + $0x118] sm:$0xff] %v642
      %793 = vst [vmem:[%s145 + $0x120] sm:$0xff] %v647
      %794 = vst [vmem:[%s145 + $0x128] sm:$0xff] %v650
      %795 = vst [vmem:[%s145 + $0x130] sm:$0xff] %v655
      %796 = vst [vmem:[%s145 + $0x138] sm:$0xff] %v658
      %797 = vst [vmem:[%s145 + $0x140] sm:$0xff] %v663
      %798 = vst [vmem:[%s145 + $0x148] sm:$0xff] %v666
      %799 = vst [vmem:[%s145 + $0x150] sm:$0xff] %v671
      %800 = vst [vmem:[%s145 + $0x158] sm:$0xff] %v674
      %801 = vst [vmem:[%s145 + $0x160] sm:$0xff] %v679
      %802 = vst [vmem:[%s145 + $0x168] sm:$0xff] %v682
      %803 = vst [vmem:[%s145 + $0x170] sm:$0xff] %v687
      %804 = vst [vmem:[%s145 + $0x178] sm:$0xff] %v690
      %805 = vst [vmem:[%s145 + $0x180] sm:$0xff] %v695
      %806 = vst [vmem:[%s145 + $0x188] sm:$0xff] %v698
      %807 = vst [vmem:[%s145 + $0x190] sm:$0xff] %v703
      %808 = vst [vmem:[%s145 + $0x198] sm:$0xff] %v706
      %809 = vst [vmem:[%s145 + $0x1a0] sm:$0xff] %v711
      %810 = vst [vmem:[%s145 + $0x1a8] sm:$0xff] %v714
      %811 = vst [vmem:[%s145 + $0x1b0] sm:$0xff] %v719
      %812 = vst [vmem:[%s145 + $0x1b8] sm:$0xff] %v722
      %813 = vst [vmem:[%s145 + $0x1c0] sm:$0xff] %v727
      %814 = vst [vmem:[%s145 + $0x1c8] sm:$0xff] %v730
      %815 = vst [vmem:[%s145 + $0x1d0] sm:$0xff] %v735
      %816 = vst [vmem:[%s145 + $0x1d8] sm:$0xff] %v738
      %817 = vst [vmem:[%s145 + $0x1e0] sm:$0xff] %v743
      %818 = vst [vmem:[%s145 + $0x1e8] sm:$0xff] %v746
      %819 = vst [vmem:[%s145 + $0x1f0] sm:$0xff] %v751
      %820 = vst [vmem:[%s145 + $0x1f8] sm:$0xff] %v754
      %s821 = smul.u32 64, %s13
      %p822 = scmp.lt.s32.totalorder %s821, 319
      %s823 = scalar_select %p822, %s821, 319
      %s824 = smul.addr %s823, 8
      %s825 = scalar_lea.vmem %s2, %s824
      // Predicated region
      $region29: #{a_call__.2} parent=27 // pred_check
        %p826 = pneg %p78
      $region30: #{a_call__.2} parent=27 // pred_check_branch
        %828 = sbr.rel (%p826) target = $region32
      $region31: #{a_call__.2} parent=27 // pred_region
        %s829 = smul.u32 64, %s13
      $region32: #{a_call__.2} parent=27 // pred_fallthru
        _
    $region28: #{a_call__.2} parent=5 // pred_fallthru
      _
    %p830 = scmp.le.s32.totalorder 2, %s8
    // Predicated region
    $region33: #{a_call__.2} parent=5 // pred_check
      %p831 = pneg %p830
    $region34: #{a_call__.2} parent=5 // pred_check_branch
      %833 = sbr.rel (%p831) target = $region36
    $region35: #{a_call__.2} parent=5 // pred_region
      %s834 = ssub.s32 %s8, 2
      // Predicated region
      $region37: #{a_call__.2} parent=35 // pred_check
        %p835 = pneg %p84
      $region38: #{a_call__.2} parent=35 // pred_check_branch
        %837 = sbr.rel (%p835) target = $region40
      $region39: #{a_call__.2} parent=35 // pred_region
        %s838 = smul.u32 64, %s14
        %p839 = scmp.lt.s32.totalorder %s838, 319
        %s840 = scalar_select %p839, %s838, 319
        %s841 = smul.addr %s840, 8
        %s842 = scalar_lea.vmem %s2, %s841
      $region40: #{a_call__.2} parent=35 // pred_fallthru
        _
    $region36: #{a_call__.2} parent=5 // pred_fallthru
      _
  $region6: #{a_call__.2} parent=0 // loop_footer
    %s12 = sadd.s32 1, %s8
  $region7: #{a_call__.2} parent=0 // loop_footer_branch
    %7 = sbr.rel target = $region3
  $region8: #{a_call__.2} parent=0 // loop_exit
    _

// kernel: a_call__.3
$region0: #{a_call__.3}
  #allocation0 [shape = 'u32[]', space=smem, size = 0x4, offset = 0x4, fixed_abs, tag = 'smem constant byte address 0x4 - core index']
  #allocation1 [shape = 'u32[144,128]{1,0:T(1,128)}', space=vmem, size = 0x12000, scoped, tag = 'internal scratch']
  %s0 = inlined_call_operand.vmem [shape: bf16[2560,256], index: 0, kind: input, shape index: {}]
  %s1 = inlined_call_operand.vmem [shape: bf16[256,128], index: 1, kind: input, shape index: {}]
  %s2 = inlined_call_operand.vmem [shape: f32[2560,128], index: 2, kind: output, shape index: {}]
  %s3 = sld [smem:[#allocation0]]
  $region41: #{a_call__.3} parent=0
    _
  %s5 = ssub.s32 1, %s3
  %s6 = scalar_select 0, %s5, %s3
  loop: start=0, step=1, limit=7
  $region2: #{a_call__.3} parent=0 // loop_pre_header
    _
  $region3: #{a_call__.3} parent=0 // loop_header
    %s8 = sphi 0, %s12
    %p9 = scmp.ge.s32.totalorder %s8, 7
    %s18 = sphi 0, %s20
    %s21 = sphi 0, %s18
    %s22 = sphi 0, %s21
    %s38 = sphi 0, %s22
    %s42 = sphi 0, %s42
    %s44 = sphi 0, %s42
    %s45 = sphi 0, %s44
    %s59 = sphi 0, %s45
    %s65 = sphi 0, %s67
    %s68 = sphi 0, %s65
    %s69 = sphi 0, %s68
    %s85 = sphi 0, %s69
  $region4: #{a_call__.3} parent=0 // loop_header_branch
    %11 = sbr.rel (%p9) target = $region8
  $region5: #{a_call__.3} parent=0 // loop_body
    %s13 = ssub.s32 %s8, 1
    %s14 = ssub.s32 %s8, 2
    %s15 = sadd.s32 %s8, 1
    %s16 = ssub.s32 %s8, %s15
    %p17 = scmp.eq.s32.totalorder %s16, 0
    %s19 = sadd.s32 %s18, 1
    %s20 = scalar_select %p17, %s18, %s19
    %p23 = pneg %p17
    %p24 = scmp.eq.s32.totalorder %s8, 4
    %p25 = por %p23, %p24
    %p26 = scmp.ne.s32.totalorder %s18, %s21
    %p27 = scmp.eq.s32.totalorder %s8, 0
    %p28 = por %p26, %p27
    %p29 = scmp.ne.s32.totalorder %s18, %s21
    %p30 = scmp.eq.s32.totalorder %s13, 4
    %p31 = por %p29, %p30
    %p32 = scmp.ne.s32.totalorder %s21, %s22
    %p33 = scmp.eq.s32.totalorder %s13, 0
    %p34 = por %p32, %p33
    %p35 = scmp.ne.s32.totalorder %s21, %s22
    %p36 = scmp.eq.s32.totalorder %s14, 4
    %p37 = por %p35, %p36
    %p39 = scmp.ne.s32.totalorder %s22, %s38
    %p40 = scmp.eq.s32.totalorder %s14, 0
    %p41 = por %p39, %p40
    %s43 = sadd.s32 %s42, 1
    %p46 = scmp.eq.s32.totalorder %s8, 4
    %p47 = scmp.ne.s32.totalorder %s42, %s44
    %p48 = scmp.eq.s32.totalorder %s8, 0
    %p49 = por %p47, %p48
    %p50 = scmp.ne.s32.totalorder %s42, %s44
    %p51 = scmp.eq.s32.totalorder %s13, 4
    %p52 = por %p50, %p51
    %p53 = scmp.ne.s32.totalorder %s44, %s45
    %p54 = scmp.eq.s32.totalorder %s13, 0
    %p55 = por %p53, %p54
    %p56 = scmp.ne.s32.totalorder %s44, %s45
    %p57 = scmp.eq.s32.totalorder %s14, 4
    %p58 = por %p56, %p57
    %p60 = scmp.ne.s32.totalorder %s45, %s59
    %p61 = scmp.eq.s32.totalorder %s14, 0
    %p62 = por %p60, %p61
    %s63 = ssub.s32 %s8, %s15
    %p64 = scmp.eq.s32.totalorder %s63, 0
    %s66 = sadd.s32 %s65, 1
    %s67 = scalar_select %p64, %s65, %s66
    %p70 = pneg %p64
    %p71 = scmp.eq.s32.totalorder %s8, 4
    %p72 = por %p70, %p71
    %p73 = scmp.ne.s32.totalorder %s65, %s68
    %p74 = scmp.eq.s32.totalorder %s8, 0
    %p75 = por %p73, %p74
    %p76 = scmp.ne.s32.totalorder %s65, %s68
    %p77 = scmp.eq.s32.totalorder %s13, 4
    %p78 = por %p76, %p77
    %p79 = scmp.ne.s32.totalorder %s68, %s69
    %p80 = scmp.eq.s32.totalorder %s13, 0
    %p81 = por %p79, %p80
    %p82 = scmp.ne.s32.totalorder %s68, %s69
    %p83 = scmp.eq.s32.totalorder %s14, 4
    %p84 = por %p82, %p83
    %p86 = scmp.ne.s32.totalorder %s69, %s85
    %p87 = scmp.eq.s32.totalorder %s14, 0
    %p88 = por %p86, %p87
    %p89 = scmp.le.s32.totalorder 1, %s8
    %p90 = scmp.lt.s32.totalorder %s8, 6
    %p91 = pnand %p89, %p90
    %p92 = pneg %p91
    // Predicated region
    $region9: #{a_call__.3} parent=5 // pred_check
      _
    $region10: #{a_call__.3} parent=5 // pred_check_branch
      %94 = sbr.rel (%p91) target = $region12
    $region11: #{a_call__.3} parent=5 // pred_region
      %s95 = ssub.s32 %s8, 1
      // Predicated region
      $region13: #{a_call__.3} parent=11 // pred_check
        %p96 = pneg %p55
      $region14: #{a_call__.3} parent=11 // pred_check_branch
        %98 = sbr.rel (%p96) target = $region16
      $region15: #{a_call__.3} parent=11 // pred_region
        _
      $region16: #{a_call__.3} parent=11 // pred_fallthru
        _
    $region12: #{a_call__.3} parent=5 // pred_fallthru
      _
    %p99 = scmp.lt.s32.totalorder %s8, 5
    // Predicated region
    $region17: #{a_call__.3} parent=5 // pred_check
      %p100 = pneg %p99
    $region18: #{a_call__.3} parent=5 // pred_check_branch
      %102 = sbr.rel (%p100) target = $region20
    $region19: #{a_call__.3} parent=5 // pred_region
      // Predicated region
      $region21: #{a_call__.3} parent=19 // pred_check
        %p103 = pneg %p28
      $region22: #{a_call__.3} parent=19 // pred_check_branch
        %105 = sbr.rel (%p103) target = $region24
      $region23: #{a_call__.3} parent=19 // pred_region
        %s106 = smul.u32 64, %s8
        %p107 = scmp.lt.s32.totalorder %s106, 319
        %s108 = scalar_select %p107, %s106, 319
        %s109 = smul.addr %s108, 2
        %s110 = smul.addr %s109, 4
        %s111 = scalar_lea.vmem %s0, %s110
        %s112 = smul.u32 64, %s8
      $region24: #{a_call__.3} parent=19 // pred_fallthru
        _
    $region20: #{a_call__.3} parent=5 // pred_fallthru
      _
    %p113 = scmp.le.s32.totalorder 1, %s8
    %p114 = scmp.lt.s32.totalorder %s8, 6
    %p115 = pnand %p113, %p114
    %p116 = pneg %p115
    // Predicated region
    $region25: #{a_call__.3} parent=5 // pred_check
      _
    $region26: #{a_call__.3} parent=5 // pred_check_branch
      %118 = sbr.rel (%p115) target = $region28
    $region27: #{a_call__.3} parent=5 // pred_region
      %s119 = ssub.s32 %s8, 1
      %s120 = smul.u32 64, %s13
      %p121 = scmp.lt.s32.totalorder %s120, 319
      %s122 = scalar_select %p121, %s120, 319
      %s123 = smul.addr %s122, 2
      %s124 = smul.addr %s123, 4
      %s125 = scalar_lea.vmem %s0, %s124
      %p126 = pneg %p34
      %p127 = pneg %p31
      %p128 = pneg %p55
      %p129 = pneg %p52
      %p130 = pneg %p81
      %p131 = pneg %p78
      %s132 = smul.u32 64, %s13
      %p133 = scmp.lt.s32.totalorder %s132, 319
      %s134 = scalar_select %p133, %s132, 319
      %s135 = smul.addr %s134, 8
      %s136 = scalar_lea.vmem %s2, %s135
      %s137 = smul.u32 64, %s13
      %p138 = scmp.lt.s32.totalorder %s137, 319
      %s139 = scalar_select %p138, %s137, 319
      %s140 = smul.addr %s139, 2
      %s141 = smul.addr %s140, 4
      %s142 = scalar_lea.vmem %s0, %s141
      %s143 = smul.u32 64, %s13
      %s144 = smul.u32 64, %s13
      %p145 = scmp.lt.s32.totalorder %s144, 319
      %s146 = scalar_select %p145, %s144, 319
      %s147 = smul.addr %s146, 8
      %s148 = scalar_lea.vmem %s2, %s147
      %s149 = smul.u32 64, %s13
      %v151 = vld [vmem:[%s142] sm:$0xff]
      %v152 = vld [vmem:[%s142 + $0x8] sm:$0xff]
      %v153 = vld [vmem:[%s142 + $0x10] sm:$0xff]
      %v154 = vld [vmem:[%s142 + $0x18] sm:$0xff]
      %v155 = vld [vmem:[%s142 + $0x20] sm:$0xff]
      %v156 = vld [vmem:[%s142 + $0x28] sm:$0xff]
      %v157 = vld [vmem:[%s142 + $0x30] sm:$0xff]
      %v158 = vld [vmem:[%s142 + $0x38] sm:$0xff]
      %v159 = vld [vmem:[%s142 + $0x40] sm:$0xff]
      %v160 = vld [vmem:[%s142 + $0x48] sm:$0xff]
      %v161 = vld [vmem:[%s142 + $0x50] sm:$0xff]
      %v162 = vld [vmem:[%s142 + $0x58] sm:$0xff]
      %v163 = vld [vmem:[%s142 + $0x60] sm:$0xff]
      %v164 = vld [vmem:[%s142 + $0x68] sm:$0xff]
      %v165 = vld [vmem:[%s142 + $0x70] sm:$0xff]
      %v166 = vld [vmem:[%s142 + $0x78] sm:$0xff]
      %v167 = vld [vmem:[%s142 + $0x80] sm:$0xff]
      %v168 = vld [vmem:[%s142 + $0x88] sm:$0xff]
      %v169 = vld [vmem:[%s142 + $0x90] sm:$0xff]
      %v170 = vld [vmem:[%s142 + $0x98] sm:$0xff]
      %v171 = vld [vmem:[%s142 + $0xa0] sm:$0xff]
      %v172 = vld [vmem:[%s142 + $0xa8] sm:$0xff]
      %v173 = vld [vmem:[%s142 + $0xb0] sm:$0xff]
      %v174 = vld [vmem:[%s142 + $0xb8] sm:$0xff]
      %v175 = vld [vmem:[%s142 + $0xc0] sm:$0xff]
      %v176 = vld [vmem:[%s142 + $0xc8] sm:$0xff]
      %v177 = vld [vmem:[%s142 + $0xd0] sm:$0xff]
      %v178 = vld [vmem:[%s142 + $0xd8] sm:$0xff]
      %v179 = vld [vmem:[%s142 + $0xe0] sm:$0xff]
      %v180 = vld [vmem:[%s142 + $0xe8] sm:$0xff]
      %v181 = vld [vmem:[%s142 + $0xf0] sm:$0xff]
      %v182 = vld [vmem:[%s142 + $0xf8] sm:$0xff]
      %v183 = vld [vmem:[%s142 + $0x100] sm:$0xff]
      %v184 = vld [vmem:[%s142 + $0x108] sm:$0xff]
      %v185 = vld [vmem:[%s142 + $0x110] sm:$0xff]
      %v186 = vld [vmem:[%s142 + $0x118] sm:$0xff]
      %v187 = vld [vmem:[%s142 + $0x120] sm:$0xff]
      %v188 = vld [vmem:[%s142 + $0x128] sm:$0xff]
      %v189 = vld [vmem:[%s142 + $0x130] sm:$0xff]
      %v190 = vld [vmem:[%s142 + $0x138] sm:$0xff]
      %v191 = vld [vmem:[%s142 + $0x140] sm:$0xff]
      %v192 = vld [vmem:[%s142 + $0x148] sm:$0xff]
      %v193 = vld [vmem:[%s142 + $0x150] sm:$0xff]
      %v194 = vld [vmem:[%s142 + $0x158] sm:$0xff]
      %v195 = vld [vmem:[%s142 + $0x160] sm:$0xff]
      %v196 = vld [vmem:[%s142 + $0x168] sm:$0xff]
      %v197 = vld [vmem:[%s142 + $0x170] sm:$0xff]
      %v198 = vld [vmem:[%s142 + $0x178] sm:$0xff]
      %v199 = vld [vmem:[%s142 + $0x180] sm:$0xff]
      %v200 = vld [vmem:[%s142 + $0x188] sm:$0xff]
      %v201 = vld [vmem:[%s142 + $0x190] sm:$0xff]
      %v202 = vld [vmem:[%s142 + $0x198] sm:$0xff]
      %v203 = vld [vmem:[%s142 + $0x1a0] sm:$0xff]
      %v204 = vld [vmem:[%s142 + $0x1a8] sm:$0xff]
      %v205 = vld [vmem:[%s142 + $0x1b0] sm:$0xff]
      %v206 = vld [vmem:[%s142 + $0x1b8] sm:$0xff]
      %v207 = vld [vmem:[%s142 + $0x1c0] sm:$0xff]
      %v208 = vld [vmem:[%s142 + $0x1c8] sm:$0xff]
      %v209 = vld [vmem:[%s142 + $0x1d0] sm:$0xff]
      %v210 = vld [vmem:[%s142 + $0x1d8] sm:$0xff]
      %v211 = vld [vmem:[%s142 + $0x1e0] sm:$0xff]
      %v212 = vld [vmem:[%s142 + $0x1e8] sm:$0xff]
      %v213 = vld [vmem:[%s142 + $0x1f0] sm:$0xff]
      %v214 = vld [vmem:[%s142 + $0x1f8] sm:$0xff]
      %v215 = vld [vmem:[%s1] sm:$0xf]
      %v216 = vld [vmem:[%s1 + $0x4] sm:$0xf]
      %v217 = vld [vmem:[%s1 + $0x8] sm:$0xf]
      %v218 = vld [vmem:[%s1 + $0xc] sm:$0xf]
      %v219 = vld [vmem:[%s1 + $0x10] sm:$0xf]
      %v220 = vld [vmem:[%s1 + $0x14] sm:$0xf]
      %v221 = vld [vmem:[%s1 + $0x18] sm:$0xf]
      %v222 = vld [vmem:[%s1 + $0x1c] sm:$0xf]
      %v223 = vld [vmem:[%s1 + $0x20] sm:$0xf]
      %v224 = vld [vmem:[%s1 + $0x24] sm:$0xf]
      %v225 = vld [vmem:[%s1 + $0x28] sm:$0xf]
      %v226 = vld [vmem:[%s1 + $0x2c] sm:$0xf]
      %v227 = vld [vmem:[%s1 + $0x30] sm:$0xf]
      %v228 = vld [vmem:[%s1 + $0x34] sm:$0xf]
      %v229 = vld [vmem:[%s1 + $0x38] sm:$0xf]
      %v230 = vld [vmem:[%s1 + $0x3c] sm:$0xf]
      %v231 = vld [vmem:[%s1 + $0x40] sm:$0xf]
      %v232 = vld [vmem:[%s1 + $0x44] sm:$0xf]
      %v233 = vld [vmem:[%s1 + $0x48] sm:$0xf]
      %v234 = vld [vmem:[%s1 + $0x4c] sm:$0xf]
      %v235 = vld [vmem:[%s1 + $0x50] sm:$0xf]
      %v236 = vld [vmem:[%s1 + $0x54] sm:$0xf]
      %v237 = vld [vmem:[%s1 + $0x58] sm:$0xf]
      %v238 = vld [vmem:[%s1 + $0x5c] sm:$0xf]
      %v239 = vld [vmem:[%s1 + $0x60] sm:$0xf]
      %v240 = vld [vmem:[%s1 + $0x64] sm:$0xf]
      %v241 = vld [vmem:[%s1 + $0x68] sm:$0xf]
      %v242 = vld [vmem:[%s1 + $0x6c] sm:$0xf]
      %v243 = vld [vmem:[%s1 + $0x70] sm:$0xf]
      %v244 = vld [vmem:[%s1 + $0x74] sm:$0xf]
      %v245 = vld [vmem:[%s1 + $0x78] sm:$0xf]
      %v246 = vld [vmem:[%s1 + $0x7c] sm:$0xf]
      %v311 = vunpack.c.l.b16 %v151
      %v312 = vunpack.c.h.b16 %v151
      %v313 = vunpack.c.l.b16 %v152
      %v314 = vunpack.c.h.b16 %v152
      %v315 = vunpack.c.l.b16 %v153
      %v316 = vunpack.c.h.b16 %v153
      %v317 = vunpack.c.l.b16 %v154
      %v318 = vunpack.c.h.b16 %v154
      %v319 = vunpack.c.l.b16 %v155
      %v320 = vunpack.c.h.b16 %v155
      %v321 = vunpack.c.l.b16 %v156
      %v322 = vunpack.c.h.b16 %v156
      %v323 = vunpack.c.l.b16 %v157
      %v324 = vunpack.c.h.b16 %v157
      %v325 = vunpack.c.l.b16 %v158
      %v326 = vunpack.c.h.b16 %v158
      %v327 = vunpack.c.l.b16 %v159
      %v328 = vunpack.c.h.b16 %v159
      %v329 = vunpack.c.l.b16 %v160
      %v330 = vunpack.c.h.b16 %v160
      %v331 = vunpack.c.l.b16 %v161
      %v332 = vunpack.c.h.b16 %v161
      %v333 = vunpack.c.l.b16 %v162
      %v334 = vunpack.c.h.b16 %v162
      %v335 = vunpack.c.l.b16 %v163
      %v336 = vunpack.c.h.b16 %v163
      %v337 = vunpack.c.l.b16 %v164
      %v338 = vunpack.c.h.b16 %v164
      %v339 = vunpack.c.l.b16 %v165
      %v340 = vunpack.c.h.b16 %v165
      %v341 = vunpack.c.l.b16 %v166
      %v342 = vunpack.c.h.b16 %v166
      %v343 = vunpack.c.l.b16 %v167
      %v344 = vunpack.c.h.b16 %v167
      %v345 = vunpack.c.l.b16 %v168
      %v346 = vunpack.c.h.b16 %v168
      %v347 = vunpack.c.l.b16 %v169
      %v348 = vunpack.c.h.b16 %v169
      %v349 = vunpack.c.l.b16 %v170
      %v350 = vunpack.c.h.b16 %v170
      %v351 = vunpack.c.l.b16 %v171
      %v352 = vunpack.c.h.b16 %v171
      %v353 = vunpack.c.l.b16 %v172
      %v354 = vunpack.c.h.b16 %v172
      %v355 = vunpack.c.l.b16 %v173
      %v356 = vunpack.c.h.b16 %v173
      %v357 = vunpack.c.l.b16 %v174
      %v358 = vunpack.c.h.b16 %v174
      %v359 = vunpack.c.l.b16 %v175
      %v360 = vunpack.c.h.b16 %v175
      %v361 = vunpack.c.l.b16 %v176
      %v362 = vunpack.c.h.b16 %v176
      %v363 = vunpack.c.l.b16 %v177
      %v364 = vunpack.c.h.b16 %v177
      %v365 = vunpack.c.l.b16 %v178
      %v366 = vunpack.c.h.b16 %v178
      %v367 = vunpack.c.l.b16 %v179
      %v368 = vunpack.c.h.b16 %v179
      %v369 = vunpack.c.l.b16 %v180
      %v370 = vunpack.c.h.b16 %v180
      %v371 = vunpack.c.l.b16 %v181
      %v372 = vunpack.c.h.b16 %v181
      %v373 = vunpack.c.l.b16 %v182
      %v374 = vunpack.c.h.b16 %v182
      %v375 = vunpack.c.l.b16 %v183
      %v376 = vunpack.c.h.b16 %v183
      %v377 = vunpack.c.l.b16 %v184
      %v378 = vunpack.c.h.b16 %v184
      %v379 = vunpack.c.l.b16 %v185
      %v380 = vunpack.c.h.b16 %v185
      %v381 = vunpack.c.l.b16 %v186
      %v382 = vunpack.c.h.b16 %v186
      %v383 = vunpack.c.l.b16 %v187
      %v384 = vunpack.c.h.b16 %v187
      %v385 = vunpack.c.l.b16 %v188
      %v386 = vunpack.c.h.b16 %v188
      %v387 = vunpack.c.l.b16 %v189
      %v388 = vunpack.c.h.b16 %v189
      %v389 = vunpack.c.l.b16 %v190
      %v390 = vunpack.c.h.b16 %v190
      %v391 = vunpack.c.l.b16 %v191
      %v392 = vunpack.c.h.b16 %v191
      %v393 = vunpack.c.l.b16 %v192
      %v394 = vunpack.c.h.b16 %v192
      %v395 = vunpack.c.l.b16 %v193
      %v396 = vunpack.c.h.b16 %v193
      %v397 = vunpack.c.l.b16 %v194
      %v398 = vunpack.c.h.b16 %v194
      %v399 = vunpack.c.l.b16 %v195
      %v400 = vunpack.c.h.b16 %v195
      %v401 = vunpack.c.l.b16 %v196
      %v402 = vunpack.c.h.b16 %v196
      %v403 = vunpack.c.l.b16 %v197
      %v404 = vunpack.c.h.b16 %v197
      %v405 = vunpack.c.l.b16 %v198
      %v406 = vunpack.c.h.b16 %v198
      %v407 = vunpack.c.l.b16 %v199
      %v408 = vunpack.c.h.b16 %v199
      %v409 = vunpack.c.l.b16 %v200
      %v410 = vunpack.c.h.b16 %v200
      %v411 = vunpack.c.l.b16 %v201
      %v412 = vunpack.c.h.b16 %v201
      %v413 = vunpack.c.l.b16 %v202
      %v414 = vunpack.c.h.b16 %v202
      %v415 = vunpack.c.l.b16 %v203
      %v416 = vunpack.c.h.b16 %v203
      %v417 = vunpack.c.l.b16 %v204
      %v418 = vunpack.c.h.b16 %v204
      %v419 = vunpack.c.l.b16 %v205
      %v420 = vunpack.c.h.b16 %v205
      %v421 = vunpack.c.l.b16 %v206
      %v422 = vunpack.c.h.b16 %v206
      %v423 = vunpack.c.l.b16 %v207
      %v424 = vunpack.c.h.b16 %v207
      %v425 = vunpack.c.l.b16 %v208
      %v426 = vunpack.c.h.b16 %v208
      %v427 = vunpack.c.l.b16 %v209
      %v428 = vunpack.c.h.b16 %v209
      %v429 = vunpack.c.l.b16 %v210
      %v430 = vunpack.c.h.b16 %v210
      %v431 = vunpack.c.l.b16 %v211
      %v432 = vunpack.c.h.b16 %v211
      %v433 = vunpack.c.l.b16 %v212
      %v434 = vunpack.c.h.b16 %v212
      %v435 = vunpack.c.l.b16 %v213
      %v436 = vunpack.c.h.b16 %v213
      %v437 = vunpack.c.l.b16 %v214
      %v438 = vunpack.c.h.b16 %v214
      %v439 = vpack.c.b16 %v313, %v311
      %v440 = vpack.c.b16 %v314, %v312
      %v441 = vpack.c.b16 %v317, %v315
      %v442 = vpack.c.b16 %v318, %v316
      %v443 = vpack.c.b16 %v321, %v319
      %v444 = vpack.c.b16 %v322, %v320
      %v445 = vpack.c.b16 %v325, %v323
      %v446 = vpack.c.b16 %v326, %v324
      %v447 = vpack.c.b16 %v329, %v327
      %v448 = vpack.c.b16 %v330, %v328
      %v449 = vpack.c.b16 %v333, %v331
      %v450 = vpack.c.b16 %v334, %v332
      %v451 = vpack.c.b16 %v337, %v335
      %v452 = vpack.c.b16 %v338, %v336
      %v453 = vpack.c.b16 %v341, %v339
      %v454 = vpack.c.b16 %v342, %v340
      %v455 = vpack.c.b16 %v345, %v343
      %v456 = vpack.c.b16 %v346, %v344
      %v457 = vpack.c.b16 %v349, %v347
      %v458 = vpack.c.b16 %v350, %v348
      %v459 = vpack.c.b16 %v353, %v351
      %v460 = vpack.c.b16 %v354, %v352
      %v461 = vpack.c.b16 %v357, %v355
      %v462 = vpack.c.b16 %v358, %v356
      %v463 = vpack.c.b16 %v361, %v359
      %v464 = vpack.c.b16 %v362, %v360
      %v465 = vpack.c.b16 %v365, %v363
      %v466 = vpack.c.b16 %v366, %v364
      %v467 = vpack.c.b16 %v369, %v367
      %v468 = vpack.c.b16 %v370, %v368
      %v469 = vpack.c.b16 %v373, %v371
      %v470 = vpack.c.b16 %v374, %v372
      %v471 = vpack.c.b16 %v377, %v375
      %v472 = vpack.c.b16 %v378, %v376
      %v473 = vpack.c.b16 %v381, %v379
      %v474 = vpack.c.b16 %v382, %v380
      %v475 = vpack.c.b16 %v385, %v383
      %v476 = vpack.c.b16 %v386, %v384
      %v477 = vpack.c.b16 %v389, %v387
      %v478 = vpack.c.b16 %v390, %v388
      %v479 = vpack.c.b16 %v393, %v391
      %v480 = vpack.c.b16 %v394, %v392
      %v481 = vpack.c.b16 %v397, %v395
      %v482 = vpack.c.b16 %v398, %v396
      %v483 = vpack.c.b16 %v401, %v399
      %v484 = vpack.c.b16 %v402, %v400
      %v485 = vpack.c.b16 %v405, %v403
      %v486 = vpack.c.b16 %v406, %v404
      %v487 = vpack.c.b16 %v409, %v407
      %v488 = vpack.c.b16 %v410, %v408
      %v489 = vpack.c.b16 %v413, %v411
      %v490 = vpack.c.b16 %v414, %v412
      %v491 = vpack.c.b16 %v417, %v415
      %v492 = vpack.c.b16 %v418, %v416
      %v493 = vpack.c.b16 %v421, %v419
      %v494 = vpack.c.b16 %v422, %v420
      %v495 = vpack.c.b16 %v425, %v423
      %v496 = vpack.c.b16 %v426, %v424
      %v497 = vpack.c.b16 %v429, %v427
      %v498 = vpack.c.b16 %v430, %v428
      %v499 = vpack.c.b16 %v433, %v431
      %v500 = vpack.c.b16 %v434, %v432
      %v501 = vpack.c.b16 %v437, %v435
      %v502 = vpack.c.b16 %v438, %v436
      %v599 = vunpack.c.l.b16 %v215
      %v600 = vunpack.c.l.b16 %v216
      %v601 = vunpack.c.l.b16 %v217
      %v602 = vunpack.c.l.b16 %v218
      %v603 = vunpack.c.l.b16 %v219
      %v604 = vunpack.c.l.b16 %v220
      %v605 = vunpack.c.l.b16 %v221
      %v606 = vunpack.c.l.b16 %v222
      %v607 = vunpack.c.l.b16 %v223
      %v608 = vunpack.c.l.b16 %v224
      %v609 = vunpack.c.l.b16 %v225
      %v610 = vunpack.c.l.b16 %v226
      %v611 = vunpack.c.l.b16 %v227
      %v612 = vunpack.c.l.b16 %v228
      %v613 = vunpack.c.l.b16 %v229
      %v614 = vunpack.c.l.b16 %v230
      %v615 = vunpack.c.l.b16 %v231
      %v616 = vunpack.c.l.b16 %v232
      %v617 = vunpack.c.l.b16 %v233
      %v618 = vunpack.c.l.b16 %v234
      %v619 = vunpack.c.l.b16 %v235
      %v620 = vunpack.c.l.b16 %v236
      %v621 = vunpack.c.l.b16 %v237
      %v622 = vunpack.c.l.b16 %v238
      %v623 = vunpack.c.l.b16 %v239
      %v624 = vunpack.c.l.b16 %v240
      %v625 = vunpack.c.l.b16 %v241
      %v626 = vunpack.c.l.b16 %v242
      %v627 = vunpack.c.l.b16 %v243
      %v628 = vunpack.c.l.b16 %v244
      %v629 = vunpack.c.l.b16 %v245
      %v630 = vunpack.c.l.b16 %v246
      %v631 = vpack.c.b16 %v600, %v599
      %v632 = vpack.c.b16 %v602, %v601
      %v633 = vpack.c.b16 %v604, %v603
      %v634 = vpack.c.b16 %v606, %v605
      %v635 = vpack.c.b16 %v608, %v607
      %v636 = vpack.c.b16 %v610, %v609
      %v637 = vpack.c.b16 %v612, %v611
      %v638 = vpack.c.b16 %v614, %v613
      %v639 = vpack.c.b16 %v616, %v615
      %v640 = vpack.c.b16 %v618, %v617
      %v641 = vpack.c.b16 %v620, %v619
      %v642 = vpack.c.b16 %v622, %v621
      %v643 = vpack.c.b16 %v624, %v623
      %v644 = vpack.c.b16 %v626, %v625
      %v645 = vpack.c.b16 %v628, %v627
      %v646 = vpack.c.b16 %v630, %v629
      %663 = vmatprep.subr.bf16.mxu0 0
      %664 = vmatpush1.bf16.msra.mxu0 %v631
      %665 = vmatprep.subr.bf16.mxu0 0
      %666 = vmatpush1.bf16.msra.mxu0 %v632
      %667 = vmatprep.subr.bf16.mxu0 0
      %668 = vmatpush1.bf16.msra.mxu0 %v633
      %669 = vmatprep.subr.bf16.mxu0 0
      %670 = vmatpush1.bf16.msra.mxu0 %v634
      %671 = vmatprep.subr.bf16.mxu0 0
      %672 = vmatpush1.bf16.msra.mxu0 %v635
      %673 = vmatprep.subr.bf16.mxu0 0
      %674 = vmatpush1.bf16.msra.mxu0 %v636
      %675 = vmatprep.subr.bf16.mxu0 0
      %676 = vmatpush1.bf16.msra.mxu0 %v637
      %677 = vmatprep.subr.bf16.mxu0 0
      %678 = vmatpush1.bf16.msra.mxu0 %v638
      %679 = vmatprep.subr.bf16.mxu0 0
      %680 = vmatpush1.bf16.msra.mxu0 %v639
      %681 = vmatprep.subr.bf16.mxu0 0
      %682 = vmatpush1.bf16.msra.mxu0 %v640
      %683 = vmatprep.subr.bf16.mxu0 0
      %684 = vmatpush1.bf16.msra.mxu0 %v641
      %685 = vmatprep.subr.bf16.mxu0 0
      %686 = vmatpush1.bf16.msra.mxu0 %v642
      %687 = vmatprep.subr.bf16.mxu0 0
      %688 = vmatpush1.bf16.msra.mxu0 %v643
      %689 = vmatprep.subr.bf16.mxu0 0
      %690 = vmatpush1.bf16.msra.mxu0 %v644
      %691 = vmatprep.subr.bf16.mxu0 0
      %692 = vmatpush1.bf16.msra.mxu0 %v645
      %693 = vmatprep.subr.bf16.mxu0 0
      %694 = vmatpush1.bf16.msra.mxu0 %v646
      %695 = vmatprep.mubr.bf16.mxu0 %v440
      %696 = vmatmul.mubr.bf16.gmra.mrb[0].mxu0 %v439
      %v697 = vpop.f32.mrb[0].mxu0
      %v698 = vadd.f32 0.0, %v697
      %v699 = vpop.f32.mrb[0].mxu0
      %v700 = vpop.f32.mrb[0].mxu0
      %v701 = vadd.f32 0.0, %v700
      %v702 = vpop.f32.mrb[0].mxu0
      %703 = vmatprep.mubr.bf16.mxu0 %v442
      %704 = vmatmul.mubr.bf16.gmra.mrb[0].mxu0 %v441
      %v705 = vpop.f32.mrb[0].mxu0
      %v706 = vadd.f32 0.0, %v705
      %v707 = vpop.f32.mrb[0].mxu0
      %v708 = vpop.f32.mrb[0].mxu0
      %v709 = vadd.f32 0.0, %v708
      %v710 = vpop.f32.mrb[0].mxu0
      %711 = vmatprep.mubr.bf16.mxu0 %v444
      %712 = vmatmul.mubr.bf16.gmra.mrb[0].mxu0 %v443
      %v713 = vpop.f32.mrb[0].mxu0
      %v714 = vadd.f32 0.0, %v713
      %v715 = vpop.f32.mrb[0].mxu0
      %v716 = vpop.f32.mrb[0].mxu0
      %v717 = vadd.f32 0.0, %v716
      %v718 = vpop.f32.mrb[0].mxu0
      %719 = vmatprep.mubr.bf16.mxu0 %v446
      %720 = vmatmul.mubr.bf16.gmra.mrb[0].mxu0 %v445
      %v721 = vpop.f32.mrb[0].mxu0
      %v722 = vadd.f32 0.0, %v721
      %v723 = vpop.f32.mrb[0].mxu0
      %v724 = vpop.f32.mrb[0].mxu0
      %v725 = vadd.f32 0.0, %v724
      %v726 = vpop.f32.mrb[0].mxu0
      %727 = vmatprep.mubr.bf16.mxu0 %v448
      %728 = vmatmul.mubr.bf16.gmra.mrb[0].mxu0 %v447
      %v729 = vpop.f32.mrb[0].mxu0
      %v730 = vadd.f32 0.0, %v729
      %v731 = vpop.f32.mrb[0].mxu0
      %v732 = vpop.f32.mrb[0].mxu0
      %v733 = vadd.f32 0.0, %v732
      %v734 = vpop.f32.mrb[0].mxu0
      %735 = vmatprep.mubr.bf16.mxu0 %v450
      %736 = vmatmul.mubr.bf16.gmra.mrb[0].mxu0 %v449
      %v737 = vpop.f32.mrb[0].mxu0
      %v738 = vadd.f32 0.0, %v737
      %v739 = vpop.f32.mrb[0].mxu0
      %v740 = vpop.f32.mrb[0].mxu0
      %v741 = vadd.f32 0.0, %v740
      %v742 = vpop.f32.mrb[0].mxu0
      %743 = vmatprep.mubr.bf16.mxu0 %v452
      %744 = vmatmul.mubr.bf16.gmra.mrb[0].mxu0 %v451
      %v745 = vpop.f32.mrb[0].mxu0
      %v746 = vadd.f32 0.0, %v745
      %v747 = vpop.f32.mrb[0].mxu0
      %v748 = vpop.f32.mrb[0].mxu0
      %v749 = vadd.f32 0.0, %v748
      %v750 = vpop.f32.mrb[0].mxu0
      %751 = vmatprep.mubr.bf16.mxu0 %v454
      %752 = vmatmul.mubr.bf16.gmra.mrb[0].mxu0 %v453
      %v753 = vpop.f32.mrb[0].mxu0
      %v754 = vadd.f32 0.0, %v753
      %v755 = vpop.f32.mrb[0].mxu0
      %v756 = vpop.f32.mrb[0].mxu0
      %v757 = vadd.f32 0.0, %v756
      %v758 = vpop.f32.mrb[0].mxu0
      %759 = vmatprep.mubr.bf16.mxu0 %v456
      %760 = vmatmul.mubr.bf16.gmra.mrb[0].mxu0 %v455
      %v761 = vpop.f32.mrb[0].mxu0
      %v762 = vadd.f32 0.0, %v761
      %v763 = vpop.f32.mrb[0].mxu0
      %v764 = vpop.f32.mrb[0].mxu0
      %v765 = vadd.f32 0.0, %v764
      %v766 = vpop.f32.mrb[0].mxu0
      %767 = vmatprep.mubr.bf16.mxu0 %v458
      %768 = vmatmul.mubr.bf16.gmra.mrb[0].mxu0 %v457
      %v769 = vpop.f32.mrb[0].mxu0
      %v770 = vadd.f32 0.0, %v769
      %v771 = vpop.f32.mrb[0].mxu0
      %v772 = vpop.f32.mrb[0].mxu0
      %v773 = vadd.f32 0.0, %v772
      %v774 = vpop.f32.mrb[0].mxu0
      %775 = vmatprep.mubr.bf16.mxu0 %v460
      %776 = vmatmul.mubr.bf16.gmra.mrb[0].mxu0 %v459
      %v777 = vpop.f32.mrb[0].mxu0
      %v778 = vadd.f32 0.0, %v777
      %v779 = vpop.f32.mrb[0].mxu0
      %v780 = vpop.f32.mrb[0].mxu0
      %v781 = vadd.f32 0.0, %v780
      %v782 = vpop.f32.mrb[0].mxu0
      %783 = vmatprep.mubr.bf16.mxu0 %v462
      %784 = vmatmul.mubr.bf16.gmra.mrb[0].mxu0 %v461
      %v785 = vpop.f32.mrb[0].mxu0
      %v786 = vadd.f32 0.0, %v785
      %v787 = vpop.f32.mrb[0].mxu0
      %v788 = vpop.f32.mrb[0].mxu0
      %v789 = vadd.f32 0.0, %v788
      %v790 = vpop.f32.mrb[0].mxu0
      %791 = vmatprep.mubr.bf16.mxu0 %v464
      %792 = vmatmul.mubr.bf16.gmra.mrb[0].mxu0 %v463
      %v793 = vpop.f32.mrb[0].mxu0
      %v794 = vadd.f32 0.0, %v793
      %v795 = vpop.f32.mrb[0].mxu0
      %v796 = vpop.f32.mrb[0].mxu0
      %v797 = vadd.f32 0.0, %v796
      %v798 = vpop.f32.mrb[0].mxu0
      %799 = vmatprep.mubr.bf16.mxu0 %v466
      %800 = vmatmul.mubr.bf16.gmra.mrb[0].mxu0 %v465
      %v801 = vpop.f32.mrb[0].mxu0
      %v802 = vadd.f32 0.0, %v801
      %v803 = vpop.f32.mrb[0].mxu0
      %v804 = vpop.f32.mrb[0].mxu0
      %v805 = vadd.f32 0.0, %v804
      %v806 = vpop.f32.mrb[0].mxu0
      %807 = vmatprep.mubr.bf16.mxu0 %v468
      %808 = vmatmul.mubr.bf16.gmra.mrb[0].mxu0 %v467
      %v809 = vpop.f32.mrb[0].mxu0
      %v810 = vadd.f32 0.0, %v809
      %v811 = vpop.f32.mrb[0].mxu0
      %v812 = vpop.f32.mrb[0].mxu0
      %v813 = vadd.f32 0.0, %v812
      %v814 = vpop.f32.mrb[0].mxu0
      %815 = vmatprep.mubr.bf16.mxu0 %v470
      %816 = vmatmul.mubr.bf16.gmra.mrb[0].mxu0 %v469
      %v817 = vpop.f32.mrb[0].mxu0
      %v818 = vadd.f32 0.0, %v817
      %v819 = vpop.f32.mrb[0].mxu0
      %v820 = vpop.f32.mrb[0].mxu0
      %v821 = vadd.f32 0.0, %v820
      %v822 = vpop.f32.mrb[0].mxu0
      %823 = vmatprep.mubr.bf16.mxu0 %v472
      %824 = vmatmul.mubr.bf16.gmra.mrb[0].mxu0 %v471
      %v825 = vpop.f32.mrb[0].mxu0
      %v826 = vadd.f32 0.0, %v825
      %v827 = vpop.f32.mrb[0].mxu0
      %v828 = vpop.f32.mrb[0].mxu0
      %v829 = vadd.f32 0.0, %v828
      %v830 = vpop.f32.mrb[0].mxu0
      %831 = vmatprep.mubr.bf16.mxu0 %v474
      %832 = vmatmul.mubr.bf16.gmra.mrb[0].mxu0 %v473
      %v833 = vpop.f32.mrb[0].mxu0
      %v834 = vadd.f32 0.0, %v833
      %v835 = vpop.f32.mrb[0].mxu0
      %v836 = vpop.f32.mrb[0].mxu0
      %v837 = vadd.f32 0.0, %v836
      %v838 = vpop.f32.mrb[0].mxu0
      %839 = vmatprep.mubr.bf16.mxu0 %v476
      %840 = vmatmul.mubr.bf16.gmra.mrb[0].mxu0 %v475
      %v841 = vpop.f32.mrb[0].mxu0
      %v842 = vadd.f32 0.0, %v841
      %v843 = vpop.f32.mrb[0].mxu0
      %v844 = vpop.f32.mrb[0].mxu0
      %v845 = vadd.f32 0.0, %v844
      %v846 = vpop.f32.mrb[0].mxu0
      %847 = vmatprep.mubr.bf16.mxu0 %v478
      %848 = vmatmul.mubr.bf16.gmra.mrb[0].mxu0 %v477
      %v849 = vpop.f32.mrb[0].mxu0
      %v850 = vadd.f32 0.0, %v849
      %v851 = vpop.f32.mrb[0].mxu0
      %v852 = vpop.f32.mrb[0].mxu0
      %v853 = vadd.f32 0.0, %v852
      %v854 = vpop.f32.mrb[0].mxu0
      %855 = vmatprep.mubr.bf16.mxu0 %v480
      %856 = vmatmul.mubr.bf16.gmra.mrb[0].mxu0 %v479
      %v857 = vpop.f32.mrb[0].mxu0
      %v858 = vadd.f32 0.0, %v857
      %v859 = vpop.f32.mrb[0].mxu0
      %v860 = vpop.f32.mrb[0].mxu0
      %v861 = vadd.f32 0.0, %v860
      %v862 = vpop.f32.mrb[0].mxu0
      %863 = vmatprep.mubr.bf16.mxu0 %v482
      %864 = vmatmul.mubr.bf16.gmra.mrb[0].mxu0 %v481
      %v865 = vpop.f32.mrb[0].mxu0
      %v866 = vadd.f32 0.0, %v865
      %v867 = vpop.f32.mrb[0].mxu0
      %v868 = vpop.f32.mrb[0].mxu0
      %v869 = vadd.f32 0.0, %v868
      %v870 = vpop.f32.mrb[0].mxu0
      %871 = vmatprep.mubr.bf16.mxu0 %v484
      %872 = vmatmul.mubr.bf16.gmra.mrb[0].mxu0 %v483
      %v873 = vpop.f32.mrb[0].mxu0
      %v874 = vadd.f32 0.0, %v873
      %v875 = vpop.f32.mrb[0].mxu0
      %v876 = vpop.f32.mrb[0].mxu0
      %v877 = vadd.f32 0.0, %v876
      %v878 = vpop.f32.mrb[0].mxu0
      %879 = vmatprep.mubr.bf16.mxu0 %v486
      %880 = vmatmul.mubr.bf16.gmra.mrb[0].mxu0 %v485
      %v881 = vpop.f32.mrb[0].mxu0
      %v882 = vadd.f32 0.0, %v881
      %v883 = vpop.f32.mrb[0].mxu0
      %v884 = vpop.f32.mrb[0].mxu0
      %v885 = vadd.f32 0.0, %v884
      %v886 = vpop.f32.mrb[0].mxu0
      %887 = vmatprep.mubr.bf16.mxu0 %v488
      %888 = vmatmul.mubr.bf16.gmra.mrb[0].mxu0 %v487
      %v889 = vpop.f32.mrb[0].mxu0
      %v890 = vadd.f32 0.0, %v889
      %v891 = vpop.f32.mrb[0].mxu0
      %v892 = vpop.f32.mrb[0].mxu0
      %v893 = vadd.f32 0.0, %v892
      %v894 = vpop.f32.mrb[0].mxu0
      %895 = vmatprep.mubr.bf16.mxu0 %v490
      %896 = vmatmul.mubr.bf16.gmra.mrb[0].mxu0 %v489
      %v897 = vpop.f32.mrb[0].mxu0
      %v898 = vadd.f32 0.0, %v897
      %v899 = vpop.f32.mrb[0].mxu0
      %v900 = vpop.f32.mrb[0].mxu0
      %v901 = vadd.f32 0.0, %v900
      %v902 = vpop.f32.mrb[0].mxu0
      %903 = vmatprep.mubr.bf16.mxu0 %v492
      %904 = vmatmul.mubr.bf16.gmra.mrb[0].mxu0 %v491
      %v905 = vpop.f32.mrb[0].mxu0
      %v906 = vadd.f32 0.0, %v905
      %v907 = vpop.f32.mrb[0].mxu0
      %v908 = vpop.f32.mrb[0].mxu0
      %v909 = vadd.f32 0.0, %v908
      %v910 = vpop.f32.mrb[0].mxu0
      %911 = vmatprep.mubr.bf16.mxu0 %v494
      %912 = vmatmul.mubr.bf16.gmra.mrb[0].mxu0 %v493
      %v913 = vpop.f32.mrb[0].mxu0
      %v914 = vadd.f32 0.0, %v913
      %v915 = vpop.f32.mrb[0].mxu0
      %v916 = vpop.f32.mrb[0].mxu0
      %v917 = vadd.f32 0.0, %v916
      %v918 = vpop.f32.mrb[0].mxu0
      %919 = vmatprep.mubr.bf16.mxu0 %v496
      %920 = vmatmul.mubr.bf16.gmra.mrb[0].mxu0 %v495
      %v921 = vpop.f32.mrb[0].mxu0
      %v922 = vadd.f32 0.0, %v921
      %v923 = vpop.f32.mrb[0].mxu0
      %v924 = vpop.f32.mrb[0].mxu0
      %v925 = vadd.f32 0.0, %v924
      %v926 = vpop.f32.mrb[0].mxu0
      %927 = vmatprep.mubr.bf16.mxu0 %v498
      %928 = vmatmul.mubr.bf16.gmra.mrb[0].mxu0 %v497
      %v929 = vpop.f32.mrb[0].mxu0
      %v930 = vadd.f32 0.0, %v929
      %v931 = vpop.f32.mrb[0].mxu0
      %v932 = vpop.f32.mrb[0].mxu0
      %v933 = vadd.f32 0.0, %v932
      %v934 = vpop.f32.mrb[0].mxu0
      %935 = vmatprep.mubr.bf16.mxu0 %v500
      %936 = vmatmul.mubr.bf16.gmra.mrb[0].mxu0 %v499
      %v937 = vpop.f32.mrb[0].mxu0
      %v938 = vadd.f32 0.0, %v937
      %v939 = vpop.f32.mrb[0].mxu0
      %v940 = vpop.f32.mrb[0].mxu0
      %v941 = vadd.f32 0.0, %v940
      %v942 = vpop.f32.mrb[0].mxu0
      %943 = vmatprep.mubr.bf16.mxu0 %v502
      %944 = vmatmul.mubr.bf16.gmra.mrb[0].mxu0 %v501
      %v945 = vpop.f32.mrb[0].mxu0
      %v946 = vadd.f32 0.0, %v945
      %v947 = vpop.f32.mrb[0].mxu0
      %v948 = vpop.f32.mrb[0].mxu0
      %v949 = vadd.f32 0.0, %v948
      %v950 = vpop.f32.mrb[0].mxu0
      %951 = vdwg.mxu0
      %952 = vst [vmem:[%s148] sm:$0xff] %v698
      %953 = vst [vmem:[%s148 + $0x8] sm:$0xff] %v701
      %954 = vst [vmem:[%s148 + $0x10] sm:$0xff] %v706
      %955 = vst [vmem:[%s148 + $0x18] sm:$0xff] %v709
      %956 = vst [vmem:[%s148 + $0x20] sm:$0xff] %v714
      %957 = vst [vmem:[%s148 + $0x28] sm:$0xff] %v717
      %958 = vst [vmem:[%s148 + $0x30] sm:$0xff] %v722
      %959 = vst [vmem:[%s148 + $0x38] sm:$0xff] %v725
      %960 = vst [vmem:[%s148 + $0x40] sm:$0xff] %v730
      %961 = vst [vmem:[%s148 + $0x48] sm:$0xff] %v733
      %962 = vst [vmem:[%s148 + $0x50] sm:$0xff] %v738
      %963 = vst [vmem:[%s148 + $0x58] sm:$0xff] %v741
      %964 = vst [vmem:[%s148 + $0x60] sm:$0xff] %v746
      %965 = vst [vmem:[%s148 + $0x68] sm:$0xff] %v749
      %966 = vst [vmem:[%s148 + $0x70] sm:$0xff] %v754
      %967 = vst [vmem:[%s148 + $0x78] sm:$0xff] %v757
      %968 = vst [vmem:[%s148 + $0x80] sm:$0xff] %v762
      %969 = vst [vmem:[%s148 + $0x88] sm:$0xff] %v765
      %970 = vst [vmem:[%s148 + $0x90] sm:$0xff] %v770
      %971 = vst [vmem:[%s148 + $0x98] sm:$0xff] %v773
      %972 = vst [vmem:[%s148 + $0xa0] sm:$0xff] %v778
      %973 = vst [vmem:[%s148 + $0xa8] sm:$0xff] %v781
      %974 = vst [vmem:[%s148 + $0xb0] sm:$0xff] %v786
      %975 = vst [vmem:[%s148 + $0xb8] sm:$0xff] %v789
      %976 = vst [vmem:[%s148 + $0xc0] sm:$0xff] %v794
      %977 = vst [vmem:[%s148 + $0xc8] sm:$0xff] %v797
      %978 = vst [vmem:[%s148 + $0xd0] sm:$0xff] %v802
      %979 = vst [vmem:[%s148 + $0xd8] sm:$0xff] %v805
      %980 = vst [vmem:[%s148 + $0xe0] sm:$0xff] %v810
      %981 = vst [vmem:[%s148 + $0xe8] sm:$0xff] %v813
      %982 = vst [vmem:[%s148 + $0xf0] sm:$0xff] %v818
      %983 = vst [vmem:[%s148 + $0xf8] sm:$0xff] %v821
      %984 = vst [vmem:[%s148 + $0x100] sm:$0xff] %v826
      %985 = vst [vmem:[%s148 + $0x108] sm:$0xff] %v829
      %986 = vst [vmem:[%s148 + $0x110] sm:$0xff] %v834
      %987 = vst [vmem:[%s148 + $0x118] sm:$0xff] %v837
      %988 = vst [vmem:[%s148 + $0x120] sm:$0xff] %v842
      %989 = vst [vmem:[%s148 + $0x128] sm:$0xff] %v845
      %990 = vst [vmem:[%s148 + $0x130] sm:$0xff] %v850
      %991 = vst [vmem:[%s148 + $0x138] sm:$0xff] %v853
      %992 = vst [vmem:[%s148 + $0x140] sm:$0xff] %v858
      %993 = vst [vmem:[%s148 + $0x148] sm:$0xff] %v861
      %994 = vst [vmem:[%s148 + $0x150] sm:$0xff] %v866
      %995 = vst [vmem:[%s148 + $0x158] sm:$0xff] %v869
      %996 = vst [vmem:[%s148 + $0x160] sm:$0xff] %v874
      %997 = vst [vmem:[%s148 + $0x168] sm:$0xff] %v877
      %998 = vst [vmem:[%s148 + $0x170] sm:$0xff] %v882
      %999 = vst [vmem:[%s148 + $0x178] sm:$0xff] %v885
      %1000 = vst [vmem:[%s148 + $0x180] sm:$0xff] %v890
      %1001 = vst [vmem:[%s148 + $0x188] sm:$0xff] %v893
      %1002 = vst [vmem:[%s148 + $0x190] sm:$0xff] %v898
      %1003 = vst [vmem:[%s148 + $0x198] sm:$0xff] %v901
      %1004 = vst [vmem:[%s148 + $0x1a0] sm:$0xff] %v906
      %1005 = vst [vmem:[%s148 + $0x1a8] sm:$0xff] %v909
      %1006 = vst [vmem:[%s148 + $0x1b0] sm:$0xff] %v914
      %1007 = vst [vmem:[%s148 + $0x1b8] sm:$0xff] %v917
      %1008 = vst [vmem:[%s148 + $0x1c0] sm:$0xff] %v922
      %1009 = vst [vmem:[%s148 + $0x1c8] sm:$0xff] %v925
      %1010 = vst [vmem:[%s148 + $0x1d0] sm:$0xff] %v930
      %1011 = vst [vmem:[%s148 + $0x1d8] sm:$0xff] %v933
      %1012 = vst [vmem:[%s148 + $0x1e0] sm:$0xff] %v938
      %1013 = vst [vmem:[%s148 + $0x1e8] sm:$0xff] %v941
      %1014 = vst [vmem:[%s148 + $0x1f0] sm:$0xff] %v946
      %1015 = vst [vmem:[%s148 + $0x1f8] sm:$0xff] %v949
      %s1016 = smul.u32 64, %s13
      %p1017 = scmp.lt.s32.totalorder %s1016, 319
      %s1018 = scalar_select %p1017, %s1016, 319
      %s1019 = smul.addr %s1018, 8
      %s1020 = scalar_lea.vmem %s2, %s1019
      // Predicated region
      $region29: #{a_call__.3} parent=27 // pred_check
        %p1021 = pneg %p78
      $region30: #{a_call__.3} parent=27 // pred_check_branch
        %1023 = sbr.rel (%p1021) target = $region32
      $region31: #{a_call__.3} parent=27 // pred_region
        %s1024 = smul.u32 64, %s13
      $region32: #{a_call__.3} parent=27 // pred_fallthru
        _
    $region28: #{a_call__.3} parent=5 // pred_fallthru
      _
    %p1025 = scmp.le.s32.totalorder 2, %s8
    // Predicated region
    $region33: #{a_call__.3} parent=5 // pred_check
      %p1026 = pneg %p1025
    $region34: #{a_call__.3} parent=5 // pred_check_branch
      %1028 = sbr.rel (%p1026) target = $region36
    $region35: #{a_call__.3} parent=5 // pred_region
      %s1029 = ssub.s32 %s8, 2
      // Predicated region
      $region37: #{a_call__.3} parent=35 // pred_check
        %p1030 = pneg %p84
      $region38: #{a_call__.3} parent=35 // pred_check_branch
        %1032 = sbr.rel (%p1030) target = $region40
      $region39: #{a_call__.3} parent=35 // pred_region
        %s1033 = smul.u32 64, %s14
        %p1034 = scmp.lt.s32.totalorder %s1033, 319
        %s1035 = scalar_select %p1034, %s1033, 319
        %s1036 = smul.addr %s1035, 8
        %s1037 = scalar_lea.vmem %s2, %s1036
      $region40: #{a_call__.3} parent=35 // pred_fallthru
        _
    $region36: #{a_call__.3} parent=5 // pred_fallthru
      _
  $region6: #{a_call__.3} parent=0 // loop_footer
    %s12 = sadd.s32 1, %s8
  $region7: #{a_call__.3} parent=0 // loop_footer_branch
    %7 = sbr.rel target = $region3
  $region8: #{a_call__.3} parent=0 // loop_exit
    _

</llo_original>
